<compile_context>
chip_gen: v7x
topology: tpu7x:2x2x1
jax: 0.10.0
libtpu: 0.0.40
codegen_flags: <defaults>
</compile_context>

<pallas_src>
import jax
import jax.numpy as jnp
from jax.experimental import pallas as pl
from jax.experimental.pallas import tpu as pltpu

IN_FEATS = 784
HIDDEN = 500
HIDDEN_PAD = 512      # 4 * 128 lanes
OUT = 10
OUT_PAD = 128         # lane-dense output slab
TB_MAX = 512          # measured ~85% of HBM roofline at 512-row tiles


def _round_up(x, m):
    return ((x + m - 1) // m) * m


def mlp_kernel(x_ref, w1_ref, b1_ref, w2_ref, b2_ref, o_ref):
    # x tile: (TB, 784) f32 -> bf16 cast in-kernel (VPU cast hides under the
    # pipelined DMA); weights bf16; biases f32; output (TB, 128) bf16.
    x = x_ref[...].astype(jnp.bfloat16)
    h = jnp.dot(x, w1_ref[...], preferred_element_type=jnp.float32)   # (TB, 512) f32
    h = jnp.maximum(h + b1_ref[...], 0.0)                             # bias + ReLU in f32
    h = h.astype(jnp.bfloat16)                                        # MXU-native 2nd matmul
    o = jnp.dot(h, w2_ref[...], preferred_element_type=jnp.float32)   # (TB, 128) f32
    o_ref[...] = (o + b2_ref[...]).astype(o_ref.dtype)                # unmasked 128-lane store


def prepare_params(w1, b1, w2, b2):
    """One-time pad + cast of the Linear params (hoisted out of the per-call path).

    w1: (784, 500), b1: (500,) or (1, 500), w2: (500, 10), b2: (10,) or (1, 10).
    (PyTorch stores Linear weight as (out, in); here we use the transpose.)
    Zero padding keeps semantics exact: padded hidden columns stay 0 through
    ReLU and hit zero-padded W2 rows; padded output columns are sliced off.
    """
    w1p = jnp.pad(w1.astype(jnp.bfloat16), ((0, 0), (0, HIDDEN_PAD - HIDDEN)))
    b1p = jnp.pad(b1.astype(jnp.float32).reshape(1, HIDDEN),
                  ((0, 0), (0, HIDDEN_PAD - HIDDEN)))
    w2p = jnp.pad(w2.astype(jnp.bfloat16),
                  ((0, HIDDEN_PAD - HIDDEN), (0, OUT_PAD - OUT)))
    b2p = jnp.pad(b2.astype(jnp.float32).reshape(1, OUT),
                  ((0, 0), (0, OUT_PAD - OUT)))
    return w1p, b1p, w2p, b2p


def _choose_tiling(B):
    """Balanced batch tiles: multiple of 8 rows, <= TB_MAX, >= 2 (even) tiles
    when B > 16 so v7x's two TensorCores both get work."""
    num_tiles = -(-B // TB_MAX)
    if B > 16:
        num_tiles = max(num_tiles, 2)
        if num_tiles % 2:
            num_tiles += 1
    per_tile = -(-B // num_tiles)
    TB = _round_up(max(per_tile, 8), 8)
    Bp = _round_up(B, TB)
    return TB, Bp


def non_dropout_net_forward(x, padded_params):
    """x: (B, ...) flattened to (B, 784). Returns (B, 10) f32 logits."""
    w1p, b1p, w2p, b2p = padded_params
    B = x.shape[0]
    x2d = x.reshape(B, -1).astype(jnp.float32)
    assert x2d.shape[1] == IN_FEATS, "NonDropoutNet expects 784 input features"

    TB, Bp = _choose_tiling(B)
    if Bp != B:
        x2d = jnp.pad(x2d, ((0, Bp - B), (0, 0)))

    cost = pl.CostEstimate(
        flops=2 * Bp * IN_FEATS * HIDDEN_PAD + 2 * Bp * HIDDEN_PAD * OUT_PAD,
        transcendentals=0,
        bytes_accessed=(Bp * IN_FEATS * 4                       # x (f32 in)
                        + IN_FEATS * HIDDEN_PAD * 2             # W1 bf16
                        + HIDDEN_PAD * OUT_PAD * 2              # W2 bf16
                        + HIDDEN_PAD * 4 + OUT_PAD * 4          # biases f32
                        + Bp * OUT_PAD * 2),                    # out bf16
    )

    out = pl.pallas_call(
        mlp_kernel,
        out_shape=jax.ShapeDtypeStruct((Bp, OUT_PAD), jnp.bfloat16),
        grid=(Bp // TB,),
        in_specs=[
            pl.BlockSpec((TB, IN_FEATS), lambda i: (i, 0)),          # x tile (pipelined)
            pl.BlockSpec((IN_FEATS, HIDDEN_PAD), lambda i: (0, 0)),  # W1 resident
            pl.BlockSpec((1, HIDDEN_PAD), lambda i: (0, 0)),         # b1 resident
            pl.BlockSpec((HIDDEN_PAD, OUT_PAD), lambda i: (0, 0)),   # W2 resident
            pl.BlockSpec((1, OUT_PAD), lambda i: (0, 0)),            # b2 resident
        ],
        out_specs=pl.BlockSpec((TB, OUT_PAD), lambda i: (i, 0)),
        compiler_params=pltpu.CompilerParams(
            dimension_semantics=("parallel",),          # 2-TC sharding on v7x
            vmem_limit_bytes=32 * 1024 * 1024,          # explicit, portable budget
        ),
        cost_estimate=cost,
    )(x2d, w1p, b1p, w2p, b2p)

    return out[:B, :OUT].astype(jnp.float32)


def init_params(key):
    """Deterministic synthetic init matching nn.Linear shapes (784->500->10)."""
    k1, k2, k3, k4 = jax.random.split(key, 4)
    bound1 = 1.0 / jnp.sqrt(784.0)
    bound2 = 1.0 / jnp.sqrt(500.0)
    w1 = jax.random.uniform(k1, (IN_FEATS, HIDDEN), jnp.float32, -bound1, bound1)
    b1 = jax.random.uniform(k2, (1, HIDDEN), jnp.float32, -bound1, bound1)
    w2 = jax.random.uniform(k3, (HIDDEN, OUT), jnp.float32, -bound2, bound2)
    b2 = jax.random.uniform(k4, (1, OUT), jnp.float32, -bound2, bound2)
    return w1, b1, w2, b2


def _ref_forward(x, w1, b1, w2, b2):
    x2d = x.reshape(x.shape[0], -1).astype(jnp.float32)
    return jnp.maximum(x2d @ w1 + b1, 0.0) @ w2 + b2


if __name__ == "__main__":
    key = jax.random.PRNGKey(0)
    kx, kp, kx2 = jax.random.split(key, 3)
    w1, b1, w2, b2 = init_params(kp)
    padded = prepare_params(w1, b1, w2, b2)   # one-time param prep

    # Small MNIST-like input: batch=2, 1x28x28 = 784 features (NCHW).
    x = jax.random.normal(kx, (2, 1, 28, 28), jnp.float32)
    out = jax.block_until_ready(non_dropout_net_forward(x, padded))
    ref = _ref_forward(x, w1, b1, w2, b2)
    assert out.shape == (2, OUT)
    # Tolerance loosened for bf16 matmuls / bf16 output store (f32 MXU accumulation).
    assert jnp.allclose(out, ref, atol=5e-2, rtol=5e-2)

    # Multi-tile balanced path (B=300 -> 2 tiles of 152 rows, both TCs busy on v7x).
    xb = jax.random.normal(kx2, (300, 1, 28, 28), jnp.float32)
    outb = jax.block_until_ready(non_dropout_net_forward(xb, padded))
    refb = _ref_forward(xb, w1, b1, w2, b2)
    assert outb.shape == (300, OUT)
    assert jnp.allclose(outb, refb, atol=5e-2, rtol=5e-2)

    print("KERNEL_OK")
</pallas_src>

<mosaic_0001>
module attributes {stable_mosaic.version = 11 : i64} {
  func.func @mlp_kernel(%arg0: i32, %arg1: memref<8x784xf32, #tpu.memory_space<vmem>>, %arg2: memref<784x512xbf16, #tpu.memory_space<vmem>>, %arg3: memref<1x512xf32, #tpu.memory_space<vmem>>, %arg4: memref<512x128xbf16, #tpu.memory_space<vmem>>, %arg5: memref<1x128xf32, #tpu.memory_space<vmem>>, %arg6: memref<8x128xbf16, #tpu.memory_space<vmem>>) attributes {dimension_semantics = [#tpu.dimension_semantics<parallel>], iteration_bounds = array<i64: 1>, scalar_prefetch = 0 : i64, scratch_operands = 0 : i64, tpu.core_type = #tpu.core_type<tc>, window_params = [{transform_indices = @transform_0, window_bounds = array<i64: 8, 784>}, {pipeline_mode = #tpu.pipeline_mode<synchronous>, transform_indices = @transform_1, window_bounds = array<i64: 784, 512>}, {pipeline_mode = #tpu.pipeline_mode<synchronous>, transform_indices = @transform_2, window_bounds = array<i64: 1, 512>}, {pipeline_mode = #tpu.pipeline_mode<synchronous>, transform_indices = @transform_3, window_bounds = array<i64: 512, 128>}, {pipeline_mode = #tpu.pipeline_mode<synchronous>, transform_indices = @transform_4, window_bounds = array<i64: 1, 128>}, {transform_indices = @transform_5, window_bounds = array<i64: 8, 128>}]} {
    %c0 = arith.constant 0 : index
    %c0_0 = arith.constant 0 : index
    %0 = vector.load %arg1[%c0, %c0_0] : memref<8x784xf32, #tpu.memory_space<vmem>>, vector<8x784xf32>
    %1 = arith.truncf %0 : vector<8x784xf32> to vector<8x784xbf16>
    %c0_1 = arith.constant 0 : index
    %c0_2 = arith.constant 0 : index
    %2 = vector.load %arg2[%c0_1, %c0_2] : memref<784x512xbf16, #tpu.memory_space<vmem>>, vector<784x512xbf16>
    %cst = arith.constant dense<0.000000e+00> : vector<8x512xf32>
    %3 = tpu.matmul %1, %2, %cst {dimension_numbers = #tpu.dot_dimension_numbers<[1], [0], [0], [1], [0, 0, 1, 1], [], []>} : vector<8x784xbf16>, vector<784x512xbf16>, vector<8x512xf32> -> vector<8x512xf32>
    %c0_3 = arith.constant 0 : index
    %c0_4 = arith.constant 0 : index
    %4 = vector.load %arg3[%c0_3, %c0_4] : memref<1x512xf32, #tpu.memory_space<vmem>>, vector<1x512xf32>
    %5 = vector.broadcast %4 : vector<1x512xf32> to vector<8x512xf32>
    %6 = arith.addf %3, %5 : vector<8x512xf32>
    %cst_5 = arith.constant 0.000000e+00 : f32
    %7 = vector.broadcast %cst_5 : f32 to vector<8x512xf32>
    %8 = arith.maximumf %6, %7 : vector<8x512xf32>
    %9 = arith.truncf %8 : vector<8x512xf32> to vector<8x512xbf16>
    %c0_6 = arith.constant 0 : index
    %c0_7 = arith.constant 0 : index
    %10 = vector.load %arg4[%c0_6, %c0_7] : memref<512x128xbf16, #tpu.memory_space<vmem>>, vector<512x128xbf16>
    %cst_8 = arith.constant dense<0.000000e+00> : vector<8x128xf32>
    %11 = tpu.matmul %9, %10, %cst_8 {dimension_numbers = #tpu.dot_dimension_numbers<[1], [0], [0], [1], [0, 0, 1, 1], [], []>} : vector<8x512xbf16>, vector<512x128xbf16>, vector<8x128xf32> -> vector<8x128xf32>
    %c0_9 = arith.constant 0 : index
    %c0_10 = arith.constant 0 : index
    %12 = vector.load %arg5[%c0_9, %c0_10] : memref<1x128xf32, #tpu.memory_space<vmem>>, vector<1x128xf32>
    %13 = vector.broadcast %12 : vector<1x128xf32> to vector<8x128xf32>
    %14 = arith.addf %11, %13 : vector<8x128xf32>
    %15 = arith.truncf %14 : vector<8x128xf32> to vector<8x128xbf16>
    %c0_11 = arith.constant 0 : index
    %c0_12 = arith.constant 0 : index
    %16 = vector.load %arg6[%c0_11, %c0_12] : memref<8x128xbf16, #tpu.memory_space<vmem>>, vector<8x128xbf16>
    tpu.vector_store %arg6[%c0_11, %c0_12], %15 {strides = array<i32>} : memref<8x128xbf16, #tpu.memory_space<vmem>>, vector<8x128xbf16>,
    return
  }
  func.func @transform_0(%arg0: i32) -> (i32, i32) {
    %c0_i32 = arith.constant 0 : i32
    %c0_i32_0 = arith.constant 0 : i32
    return %arg0, %c0_i32 : i32, i32
  }
  func.func @transform_1(%arg0: i32) -> (i32, i32) {
    %c0_i32 = arith.constant 0 : i32
    %c0_i32_0 = arith.constant 0 : i32
    %c0_i32_1 = arith.constant 0 : i32
    return %c0_i32, %c0_i32_0 : i32, i32
  }
  func.func @transform_2(%arg0: i32) -> (i32, i32) {
    %c0_i32 = arith.constant 0 : i32
    %c0_i32_0 = arith.constant 0 : i32
    %c0_i32_1 = arith.constant 0 : i32
    return %c0_i32, %c0_i32_0 : i32, i32
  }
  func.func @transform_3(%arg0: i32) -> (i32, i32) {
    %c0_i32 = arith.constant 0 : i32
    %c0_i32_0 = arith.constant 0 : i32
    %c0_i32_1 = arith.constant 0 : i32
    return %c0_i32, %c0_i32_0 : i32, i32
  }
  func.func @transform_4(%arg0: i32) -> (i32, i32) {
    %c0_i32 = arith.constant 0 : i32
    %c0_i32_0 = arith.constant 0 : i32
    %c0_i32_1 = arith.constant 0 : i32
    return %c0_i32, %c0_i32_0 : i32, i32
  }
  func.func @transform_5(%arg0: i32) -> (i32, i32) {
    %c0_i32 = arith.constant 0 : i32
    %c0_i32_0 = arith.constant 0 : i32
    return %arg0, %c0_i32 : i32, i32
  }
}

</mosaic_0001>

<llo_original>
// kernel: tpu_custom_call.1
$region0: #{tpu_custom_call.1}
  #allocation0 [shape = 'u32[]', space=smem, size = 0x4, offset = 0x4, fixed_abs, tag = 'smem constant byte address 0x4 - core index']
  #allocation1 [shape = 'u32[144,128]{1,0:T(1,128)}', space=vmem, size = 0x12000, scoped, tag = 'internal scratch']
  %s0 = inlined_call_operand.hbm [shape: f32[8,784], index: 0, kind: input, shape index: {}]
  %s1 = inlined_call_operand.hbm [shape: bf16[784,512], index: 1, kind: input, shape index: {}]
  %s2 = inlined_call_operand.vmem [shape: f32[1,512], index: 2, kind: input, shape index: {}]
  %s3 = inlined_call_operand.hbm [shape: bf16[512,128], index: 3, kind: input, shape index: {}]
  %s4 = inlined_call_operand.vmem [shape: f32[1,128], index: 4, kind: input, shape index: {}]
  %s5 = inlined_call_operand.hbm [shape: bf16[8,128], index: 5, kind: output, shape index: {}]
  %s6 = sld [smem:[#allocation0]]
  $region42: #{tpu_custom_call.1} parent=0
    _
  %s8 = ssub.s32 1, %s6
  %s9 = scalar_select 0, %s8, %s6
  $region1: #{tpu_custom_call.1} parent=0
    #allocation2 [shape = 'u8[28672]{0}', space=vmem, size = 0x7000, scoped, tag = 'input window, operand 0, single buffered']
    #allocation3 [shape = 's32[1]{0}', space=sflag, size = 0x4, scoped, tag = 'scoped memory for tpu_custom_call.1']
    #allocation4 [shape = 's32[1]{0}', space=sflag, size = 0x4, scoped, tag = 'scoped memory for tpu_custom_call.1']
    #allocation5 [shape = 'u8[802816]{0}', space=vmem, size = 0xc4000, scoped, tag = 'input window, operand 1, single buffered']
    #allocation6 [shape = 's32[1]{0}', space=sflag, size = 0x4, scoped, tag = 'scoped memory for tpu_custom_call.1']
    #allocation7 [shape = 'u8[131072]{0}', space=vmem, size = 0x20000, scoped, tag = 'input window, operand 3, single buffered']
    #allocation8 [shape = 'u8[2048]{0}', space=vmem, size = 0x800, scoped, tag = 'output window, operand 0, single buffered']
    %10 = vsyncpa [#allocation3], 0
    %11 = vsyncpa [#allocation6], 0
    %12 = vsyncpa [#allocation4], 0
    // Predicated region
    $region2: #{tpu_custom_call.1} parent=1 // pred_check
      _
    $region3: #{tpu_custom_call.1} parent=1 // pred_check_branch
      %14 = sbr.rel (0) target = $region5
    $region4: #{tpu_custom_call.1} parent=1 // pred_region
      %s16 = ssub.s32 896, 896
      %17 = vsyncadd [#allocation3], %s16
      %s19 = sshll.u32 [#allocation2], 4
      %s20 = int_to_ptr.vmem [resolvable:$true] %s19
      %22 = dma.hbm_to_vmem [thread:$0]  %s0, 896, %s20, [#allocation3]
    $region5: #{tpu_custom_call.1} parent=1 // pred_fallthru
      _
    // Predicated region
    $region6: #{tpu_custom_call.1} parent=1 // pred_check
      _
    $region7: #{tpu_custom_call.1} parent=1 // pred_check_branch
      %24 = sbr.rel (0) target = $region9
    $region8: #{tpu_custom_call.1} parent=1 // pred_region
      %s26 = ssub.s32 25088, 25088
      %27 = vsyncadd [#allocation6], %s26
      %s28 = sshll.u32 [#allocation5], 4
      %s29 = int_to_ptr.vmem [resolvable:$true] %s28
      %34 = dma.hbm_to_vmem [thread:$0]  %s1, 25088, %s29, [#allocation6], 256, 256, 16
    $region9: #{tpu_custom_call.1} parent=1 // pred_fallthru
      _
    // Predicated region
    $region10: #{tpu_custom_call.1} parent=1 // pred_check
      _
    $region11: #{tpu_custom_call.1} parent=1 // pred_check_branch
      %36 = sbr.rel (0) target = $region13
    $region12: #{tpu_custom_call.1} parent=1 // pred_region
      _
    $region13: #{tpu_custom_call.1} parent=1 // pred_fallthru
      _
    // Predicated region
    $region14: #{tpu_custom_call.1} parent=1 // pred_check
      _
    $region15: #{tpu_custom_call.1} parent=1 // pred_check_branch
      %38 = sbr.rel (0) target = $region17
    $region16: #{tpu_custom_call.1} parent=1 // pred_region
      %s40 = ssub.s32 4096, 4096
      %41 = vsyncadd [#allocation6], %s40
      %s42 = sshll.u32 [#allocation7], 4
      %s43 = int_to_ptr.vmem [resolvable:$true] %s42
      %48 = dma.hbm_to_vmem [thread:$0]  %s3, 4096, %s43, [#allocation6], 64, 64, 4
    $region17: #{tpu_custom_call.1} parent=1 // pred_fallthru
      _
    // Predicated region
    $region18: #{tpu_custom_call.1} parent=1 // pred_check
      _
    $region19: #{tpu_custom_call.1} parent=1 // pred_check_branch
      %50 = sbr.rel (0) target = $region21
    $region20: #{tpu_custom_call.1} parent=1 // pred_region
      _
    $region21: #{tpu_custom_call.1} parent=1 // pred_fallthru
      _
    // Predicated region
    $region22: #{tpu_custom_call.1} parent=1 // pred_check
      _
    $region23: #{tpu_custom_call.1} parent=1 // pred_check_branch
      %52 = sbr.rel (0) target = $region25
    $region24: #{tpu_custom_call.1} parent=1 // pred_region
      %53 = dma.done [#allocation3], 896
    $region25: #{tpu_custom_call.1} parent=1 // pred_fallthru
      _
    // Predicated region
    $region26: #{tpu_custom_call.1} parent=1 // pred_check
      _
    $region27: #{tpu_custom_call.1} parent=1 // pred_check_branch
      %55 = sbr.rel (0) target = $region29
    $region28: #{tpu_custom_call.1} parent=1 // pred_region
      %56 = dma.done [#allocation6], 25088
    $region29: #{tpu_custom_call.1} parent=1 // pred_fallthru
      _
    // Predicated region
    $region30: #{tpu_custom_call.1} parent=1 // pred_check
      _
    $region31: #{tpu_custom_call.1} parent=1 // pred_check_branch
      %58 = sbr.rel (0) target = $region33
    $region32: #{tpu_custom_call.1} parent=1 // pred_region
      %59 = dma.done [#allocation6], 4096
    $region33: #{tpu_custom_call.1} parent=1 // pred_fallthru
      _
    %v61 = vld [vmem:[#allocation2] sm:$0xff]
    %v62 = vld [vmem:[#allocation2 + $0x8] sm:$0xff]
    %v63 = vld [vmem:[#allocation2 + $0x10] sm:$0xff]
    %v64 = vld [vmem:[#allocation2 + $0x18] sm:$0xff]
    %v65 = vld [vmem:[#allocation2 + $0x20] sm:$0xff]
    %v66 = vld [vmem:[#allocation2 + $0x28] sm:$0xff]
    %v67 = vld [vmem:[#allocation2 + $0x30] sm:$0xff]
    %v68 = vpack.c.bf16 %v61, %v61
    %v69 = vpack.c.bf16 %v62, %v62
    %v70 = vpack.c.bf16 %v63, %v63
    %v71 = vpack.c.bf16 %v64, %v64
    %v72 = vpack.c.bf16 %v65, %v65
    %v73 = vpack.c.bf16 %v66, %v66
    %v74 = vpack.c.bf16 %v67, %v67
    %v75 = vld [vmem:[#allocation5] sm:$0xff]
    %v76 = vld [vmem:[#allocation5 + $0x8] sm:$0xff]
    %v77 = vld [vmem:[#allocation5 + $0x10] sm:$0xff]
    %v78 = vld [vmem:[#allocation5 + $0x18] sm:$0xff]
    %v79 = vld [vmem:[#allocation5 + $0x20] sm:$0xff]
    %v80 = vld [vmem:[#allocation5 + $0x28] sm:$0xff]
    %v81 = vld [vmem:[#allocation5 + $0x30] sm:$0xff]
    %v82 = vld [vmem:[#allocation5 + $0x38] sm:$0xff]
    %v83 = vld [vmem:[#allocation5 + $0x40] sm:$0xff]
    %v84 = vld [vmem:[#allocation5 + $0x48] sm:$0xff]
    %v85 = vld [vmem:[#allocation5 + $0x50] sm:$0xff]
    %v86 = vld [vmem:[#allocation5 + $0x58] sm:$0xff]
    %v87 = vld [vmem:[#allocation5 + $0x60] sm:$0xff]
    %v88 = vld [vmem:[#allocation5 + $0x68] sm:$0xff]
    %v89 = vld [vmem:[#allocation5 + $0x70] sm:$0xff]
    %v90 = vld [vmem:[#allocation5 + $0x78] sm:$0xff]
    %v91 = vld [vmem:[#allocation5 + $0x80] sm:$0xff]
    %v92 = vld [vmem:[#allocation5 + $0x88] sm:$0xff]
    %v93 = vld [vmem:[#allocation5 + $0x90] sm:$0xff]
    %v94 = vld [vmem:[#allocation5 + $0x98] sm:$0xff]
    %v95 = vld [vmem:[#allocation5 + $0xa0] sm:$0xff]
    %v96 = vld [vmem:[#allocation5 + $0xa8] sm:$0xff]
    %v97 = vld [vmem:[#allocation5 + $0xb0] sm:$0xff]
    %v98 = vld [vmem:[#allocation5 + $0xb8] sm:$0xff]
    %v99 = vld [vmem:[#allocation5 + $0xc0] sm:$0xff]
    %v100 = vld [vmem:[#allocation5 + $0xc8] sm:$0xff]
    %v101 = vld [vmem:[#allocation5 + $0xd0] sm:$0xff]
    %v102 = vld [vmem:[#allocation5 + $0xd8] sm:$0xff]
    %v103 = vld [vmem:[#allocation5 + $0xe0] sm:$0xff]
    %v104 = vld [vmem:[#allocation5 + $0xe8] sm:$0xff]
    %v105 = vld [vmem:[#allocation5 + $0xf0] sm:$0xff]
    %v106 = vld [vmem:[#allocation5 + $0xf8] sm:$0xff]
    %v107 = vld [vmem:[#allocation5 + $0x100] sm:$0xff]
    %v108 = vld [vmem:[#allocation5 + $0x108] sm:$0xff]
    %v109 = vld [vmem:[#allocation5 + $0x110] sm:$0xff]
    %v110 = vld [vmem:[#allocation5 + $0x118] sm:$0xff]
    %v111 = vld [vmem:[#allocation5 + $0x120] sm:$0xff]
    %v112 = vld [vmem:[#allocation5 + $0x128] sm:$0xff]
    %v113 = vld [vmem:[#allocation5 + $0x130] sm:$0xff]
    %v114 = vld [vmem:[#allocation5 + $0x138] sm:$0xff]
    %v115 = vld [vmem:[#allocation5 + $0x140] sm:$0xff]
    %v116 = vld [vmem:[#allocation5 + $0x148] sm:$0xff]
    %v117 = vld [vmem:[#allocation5 + $0x150] sm:$0xff]
    %v118 = vld [vmem:[#allocation5 + $0x158] sm:$0xff]
    %v119 = vld [vmem:[#allocation5 + $0x160] sm:$0xff]
    %v120 = vld [vmem:[#allocation5 + $0x168] sm:$0xff]
    %v121 = vld [vmem:[#allocation5 + $0x170] sm:$0xff]
    %v122 = vld [vmem:[#allocation5 + $0x178] sm:$0xff]
    %v123 = vld [vmem:[#allocation5 + $0x180] sm:$0xff]
    %v124 = vld [vmem:[#allocation5 + $0x188] sm:$0xff]
    %v125 = vld [vmem:[#allocation5 + $0x190] sm:$0xff]
    %v126 = vld [vmem:[#allocation5 + $0x198] sm:$0xff]
    %v127 = vld [vmem:[#allocation5 + $0x1a0] sm:$0xff]
    %v128 = vld [vmem:[#allocation5 + $0x1a8] sm:$0xff]
    %v129 = vld [vmem:[#allocation5 + $0x1b0] sm:$0xff]
    %v130 = vld [vmem:[#allocation5 + $0x1b8] sm:$0xff]
    %v131 = vld [vmem:[#allocation5 + $0x1c0] sm:$0xff]
    %v132 = vld [vmem:[#allocation5 + $0x1c8] sm:$0xff]
    %v133 = vld [vmem:[#allocation5 + $0x1d0] sm:$0xff]
    %v134 = vld [vmem:[#allocation5 + $0x1d8] sm:$0xff]
    %v135 = vld [vmem:[#allocation5 + $0x1e0] sm:$0xff]
    %v136 = vld [vmem:[#allocation5 + $0x1e8] sm:$0xff]
    %v137 = vld [vmem:[#allocation5 + $0x1f0] sm:$0xff]
    %v138 = vld [vmem:[#allocation5 + $0x1f8] sm:$0xff]
    %v139 = vld [vmem:[#allocation5 + $0x200] sm:$0xff]
    %v140 = vld [vmem:[#allocation5 + $0x208] sm:$0xff]
    %v141 = vld [vmem:[#allocation5 + $0x210] sm:$0xff]
    %v142 = vld [vmem:[#allocation5 + $0x218] sm:$0xff]
    %v143 = vld [vmem:[#allocation5 + $0x220] sm:$0xff]
    %v144 = vld [vmem:[#allocation5 + $0x228] sm:$0xff]
    %v145 = vld [vmem:[#allocation5 + $0x230] sm:$0xff]
    %v146 = vld [vmem:[#allocation5 + $0x238] sm:$0xff]
    %v147 = vld [vmem:[#allocation5 + $0x240] sm:$0xff]
    %v148 = vld [vmem:[#allocation5 + $0x248] sm:$0xff]
    %v149 = vld [vmem:[#allocation5 + $0x250] sm:$0xff]
    %v150 = vld [vmem:[#allocation5 + $0x258] sm:$0xff]
    %v151 = vld [vmem:[#allocation5 + $0x260] sm:$0xff]
    %v152 = vld [vmem:[#allocation5 + $0x268] sm:$0xff]
    %v153 = vld [vmem:[#allocation5 + $0x270] sm:$0xff]
    %v154 = vld [vmem:[#allocation5 + $0x278] sm:$0xff]
    %v155 = vld [vmem:[#allocation5 + $0x280] sm:$0xff]
    %v156 = vld [vmem:[#allocation5 + $0x288] sm:$0xff]
    %v157 = vld [vmem:[#allocation5 + $0x290] sm:$0xff]
    %v158 = vld [vmem:[#allocation5 + $0x298] sm:$0xff]
    %v159 = vld [vmem:[#allocation5 + $0x2a0] sm:$0xff]
    %v160 = vld [vmem:[#allocation5 + $0x2a8] sm:$0xff]
    %v161 = vld [vmem:[#allocation5 + $0x2b0] sm:$0xff]
    %v162 = vld [vmem:[#allocation5 + $0x2b8] sm:$0xff]
    %v163 = vld [vmem:[#allocation5 + $0x2c0] sm:$0xff]
    %v164 = vld [vmem:[#allocation5 + $0x2c8] sm:$0xff]
    %v165 = vld [vmem:[#allocation5 + $0x2d0] sm:$0xff]
    %v166 = vld [vmem:[#allocation5 + $0x2d8] sm:$0xff]
    %v167 = vld [vmem:[#allocation5 + $0x2e0] sm:$0xff]
    %v168 = vld [vmem:[#allocation5 + $0x2e8] sm:$0xff]
    %v169 = vld [vmem:[#allocation5 + $0x2f0] sm:$0xff]
    %v170 = vld [vmem:[#allocation5 + $0x2f8] sm:$0xff]
    %v171 = vld [vmem:[#allocation5 + $0x300] sm:$0xff]
    %v172 = vld [vmem:[#allocation5 + $0x308] sm:$0xff]
    %v173 = vld [vmem:[#allocation5 + $0x310] sm:$0xff]
    %v174 = vld [vmem:[#allocation5 + $0x318] sm:$0xff]
    %v175 = vld [vmem:[#allocation5 + $0x320] sm:$0xff]
    %v176 = vld [vmem:[#allocation5 + $0x328] sm:$0xff]
    %v177 = vld [vmem:[#allocation5 + $0x330] sm:$0xff]
    %v178 = vld [vmem:[#allocation5 + $0x338] sm:$0xff]
    %v179 = vld [vmem:[#allocation5 + $0x340] sm:$0xff]
    %v180 = vld [vmem:[#allocation5 + $0x348] sm:$0xff]
    %v181 = vld [vmem:[#allocation5 + $0x350] sm:$0xff]
    %v182 = vld [vmem:[#allocation5 + $0x358] sm:$0xff]
    %v183 = vld [vmem:[#allocation5 + $0x360] sm:$0xff]
    %v184 = vld [vmem:[#allocation5 + $0x368] sm:$0xff]
    %v185 = vld [vmem:[#allocation5 + $0x370] sm:$0xff]
    %v186 = vld [vmem:[#allocation5 + $0x378] sm:$0xff]
    %v187 = vld [vmem:[#allocation5 + $0x380] sm:$0xff]
    %v188 = vld [vmem:[#allocation5 + $0x388] sm:$0xff]
    %v189 = vld [vmem:[#allocation5 + $0x390] sm:$0xff]
    %v190 = vld [vmem:[#allocation5 + $0x398] sm:$0xff]
    %v191 = vld [vmem:[#allocation5 + $0x3a0] sm:$0xff]
    %v192 = vld [vmem:[#allocation5 + $0x3a8] sm:$0xff]
    %v193 = vld [vmem:[#allocation5 + $0x3b0] sm:$0xff]
    %v194 = vld [vmem:[#allocation5 + $0x3b8] sm:$0xff]
    %v195 = vld [vmem:[#allocation5 + $0x3c0] sm:$0xff]
    %v196 = vld [vmem:[#allocation5 + $0x3c8] sm:$0xff]
    %v197 = vld [vmem:[#allocation5 + $0x3d0] sm:$0xff]
    %v198 = vld [vmem:[#allocation5 + $0x3d8] sm:$0xff]
    %v199 = vld [vmem:[#allocation5 + $0x3e0] sm:$0xff]
    %v200 = vld [vmem:[#allocation5 + $0x3e8] sm:$0xff]
    %v201 = vld [vmem:[#allocation5 + $0x3f0] sm:$0xff]
    %v202 = vld [vmem:[#allocation5 + $0x3f8] sm:$0xff]
    %v203 = vld [vmem:[#allocation5 + $0x400] sm:$0xff]
    %v204 = vld [vmem:[#allocation5 + $0x408] sm:$0xff]
    %v205 = vld [vmem:[#allocation5 + $0x410] sm:$0xff]
    %v206 = vld [vmem:[#allocation5 + $0x418] sm:$0xff]
    %v207 = vld [vmem:[#allocation5 + $0x420] sm:$0xff]
    %v208 = vld [vmem:[#allocation5 + $0x428] sm:$0xff]
    %v209 = vld [vmem:[#allocation5 + $0x430] sm:$0xff]
    %v210 = vld [vmem:[#allocation5 + $0x438] sm:$0xff]
    %v211 = vld [vmem:[#allocation5 + $0x440] sm:$0xff]
    %v212 = vld [vmem:[#allocation5 + $0x448] sm:$0xff]
    %v213 = vld [vmem:[#allocation5 + $0x450] sm:$0xff]
    %v214 = vld [vmem:[#allocation5 + $0x458] sm:$0xff]
    %v215 = vld [vmem:[#allocation5 + $0x460] sm:$0xff]
    %v216 = vld [vmem:[#allocation5 + $0x468] sm:$0xff]
    %v217 = vld [vmem:[#allocation5 + $0x470] sm:$0xff]
    %v218 = vld [vmem:[#allocation5 + $0x478] sm:$0xff]
    %v219 = vld [vmem:[#allocation5 + $0x480] sm:$0xff]
    %v220 = vld [vmem:[#allocation5 + $0x488] sm:$0xff]
    %v221 = vld [vmem:[#allocation5 + $0x490] sm:$0xff]
    %v222 = vld [vmem:[#allocation5 + $0x498] sm:$0xff]
    %v223 = vld [vmem:[#allocation5 + $0x4a0] sm:$0xff]
    %v224 = vld [vmem:[#allocation5 + $0x4a8] sm:$0xff]
    %v225 = vld [vmem:[#allocation5 + $0x4b0] sm:$0xff]
    %v226 = vld [vmem:[#allocation5 + $0x4b8] sm:$0xff]
    %v227 = vld [vmem:[#allocation5 + $0x4c0] sm:$0xff]
    %v228 = vld [vmem:[#allocation5 + $0x4c8] sm:$0xff]
    %v229 = vld [vmem:[#allocation5 + $0x4d0] sm:$0xff]
    %v230 = vld [vmem:[#allocation5 + $0x4d8] sm:$0xff]
    %v231 = vld [vmem:[#allocation5 + $0x4e0] sm:$0xff]
    %v232 = vld [vmem:[#allocation5 + $0x4e8] sm:$0xff]
    %v233 = vld [vmem:[#allocation5 + $0x4f0] sm:$0xff]
    %v234 = vld [vmem:[#allocation5 + $0x4f8] sm:$0xff]
    %v235 = vld [vmem:[#allocation5 + $0x500] sm:$0xff]
    %v236 = vld [vmem:[#allocation5 + $0x508] sm:$0xff]
    %v237 = vld [vmem:[#allocation5 + $0x510] sm:$0xff]
    %v238 = vld [vmem:[#allocation5 + $0x518] sm:$0xff]
    %v239 = vld [vmem:[#allocation5 + $0x520] sm:$0xff]
    %v240 = vld [vmem:[#allocation5 + $0x528] sm:$0xff]
    %v241 = vld [vmem:[#allocation5 + $0x530] sm:$0xff]
    %v242 = vld [vmem:[#allocation5 + $0x538] sm:$0xff]
    %v243 = vld [vmem:[#allocation5 + $0x540] sm:$0xff]
    %v244 = vld [vmem:[#allocation5 + $0x548] sm:$0xff]
    %v245 = vld [vmem:[#allocation5 + $0x550] sm:$0xff]
    %v246 = vld [vmem:[#allocation5 + $0x558] sm:$0xff]
    %v247 = vld [vmem:[#allocation5 + $0x560] sm:$0xff]
    %v248 = vld [vmem:[#allocation5 + $0x568] sm:$0xff]
    %v249 = vld [vmem:[#allocation5 + $0x570] sm:$0xff]
    %v250 = vld [vmem:[#allocation5 + $0x578] sm:$0xff]
    %v251 = vld [vmem:[#allocation5 + $0x580] sm:$0xff]
    %v252 = vld [vmem:[#allocation5 + $0x588] sm:$0xff]
    %v253 = vld [vmem:[#allocation5 + $0x590] sm:$0xff]
    %v254 = vld [vmem:[#allocation5 + $0x598] sm:$0xff]
    %v255 = vld [vmem:[#allocation5 + $0x5a0] sm:$0xff]
    %v256 = vld [vmem:[#allocation5 + $0x5a8] sm:$0xff]
    %v257 = vld [vmem:[#allocation5 + $0x5b0] sm:$0xff]
    %v258 = vld [vmem:[#allocation5 + $0x5b8] sm:$0xff]
    %v259 = vld [vmem:[#allocation5 + $0x5c0] sm:$0xff]
    %v260 = vld [vmem:[#allocation5 + $0x5c8] sm:$0xff]
    %v261 = vld [vmem:[#allocation5 + $0x5d0] sm:$0xff]
    %v262 = vld [vmem:[#allocation5 + $0x5d8] sm:$0xff]
    %v263 = vld [vmem:[#allocation5 + $0x5e0] sm:$0xff]
    %v264 = vld [vmem:[#allocation5 + $0x5e8] sm:$0xff]
    %v265 = vld [vmem:[#allocation5 + $0x5f0] sm:$0xff]
    %v266 = vld [vmem:[#allocation5 + $0x5f8] sm:$0xff]
    %v267 = vld [vmem:[#allocation5 + $0x600] sm:$0xff]
    %v268 = vld [vmem:[#allocation5 + $0x608] sm:$0xff]
    %v269 = vld [vmem:[#allocation5 + $0x610] sm:$0xff]
    %v270 = vld [vmem:[#allocation5 + $0x618] sm:$0xff]
    %v271 = vld [vmem:[%s2] sm:$0xf]
    %v273 = vlaneseq
    %v274 = vshrl.u32 %v273, 7
    %v275 = vsub.s32 0, %v274
    %v276 = vrot.slane %v271, %v275
    %v277 = vlaneseq
    %v278 = vshrl.u32 %v277, 7
    %v279 = vsub.s32 1, %v278
    %v280 = vrot.slane %v271, %v279
    %v281 = vlaneseq
    %v282 = vshrl.u32 %v281, 7
    %v283 = vsub.s32 2, %v282
    %v284 = vrot.slane %v271, %v283
    %v285 = vlaneseq
    %v286 = vshrl.u32 %v285, 7
    %v287 = vsub.s32 3, %v286
    %v288 = vrot.slane %v271, %v287
    %v489 = vunpack.c.l.b16 %v75
    %v490 = vunpack.c.h.b16 %v75
    %v491 = vunpack.c.l.b16 %v76
    %v492 = vunpack.c.h.b16 %v76
    %v493 = vunpack.c.l.b16 %v77
    %v494 = vunpack.c.h.b16 %v77
    %v495 = vunpack.c.l.b16 %v78
    %v496 = vunpack.c.h.b16 %v78
    %v497 = vunpack.c.l.b16 %v79
    %v498 = vunpack.c.h.b16 %v79
    %v499 = vunpack.c.l.b16 %v80
    %v500 = vunpack.c.h.b16 %v80
    %v501 = vunpack.c.l.b16 %v81
    %v502 = vunpack.c.h.b16 %v81
    %v503 = vunpack.c.l.b16 %v82
    %v504 = vunpack.c.h.b16 %v82
    %v505 = vunpack.c.l.b16 %v83
    %v506 = vunpack.c.h.b16 %v83
    %v507 = vunpack.c.l.b16 %v84
    %v508 = vunpack.c.h.b16 %v84
    %v509 = vunpack.c.l.b16 %v85
    %v510 = vunpack.c.h.b16 %v85
    %v511 = vunpack.c.l.b16 %v86
    %v512 = vunpack.c.h.b16 %v86
    %v513 = vunpack.c.l.b16 %v87
    %v514 = vunpack.c.h.b16 %v87
    %v515 = vunpack.c.l.b16 %v88
    %v516 = vunpack.c.h.b16 %v88
    %v517 = vunpack.c.l.b16 %v89
    %v518 = vunpack.c.h.b16 %v89
    %v519 = vunpack.c.l.b16 %v90
    %v520 = vunpack.c.h.b16 %v90
    %v521 = vunpack.c.l.b16 %v91
    %v522 = vunpack.c.h.b16 %v91
    %v523 = vunpack.c.l.b16 %v92
    %v524 = vunpack.c.h.b16 %v92
    %v525 = vunpack.c.l.b16 %v93
    %v526 = vunpack.c.h.b16 %v93
    %v527 = vunpack.c.l.b16 %v94
    %v528 = vunpack.c.h.b16 %v94
    %v529 = vunpack.c.l.b16 %v95
    %v530 = vunpack.c.h.b16 %v95
    %v531 = vunpack.c.l.b16 %v96
    %v532 = vunpack.c.h.b16 %v96
    %v533 = vunpack.c.l.b16 %v97
    %v534 = vunpack.c.h.b16 %v97
    %v535 = vunpack.c.l.b16 %v98
    %v536 = vunpack.c.h.b16 %v98
    %v537 = vunpack.c.l.b16 %v99
    %v538 = vunpack.c.h.b16 %v99
    %v539 = vunpack.c.l.b16 %v100
    %v540 = vunpack.c.h.b16 %v100
    %v541 = vunpack.c.l.b16 %v101
    %v542 = vunpack.c.h.b16 %v101
    %v543 = vunpack.c.l.b16 %v102
    %v544 = vunpack.c.h.b16 %v102
    %v545 = vunpack.c.l.b16 %v103
    %v546 = vunpack.c.h.b16 %v103
    %v547 = vunpack.c.l.b16 %v104
    %v548 = vunpack.c.h.b16 %v104
    %v549 = vunpack.c.l.b16 %v105
    %v550 = vunpack.c.h.b16 %v105
    %v551 = vunpack.c.l.b16 %v106
    %v552 = vunpack.c.h.b16 %v106
    %v553 = vunpack.c.l.b16 %v107
    %v554 = vunpack.c.h.b16 %v107
    %v555 = vunpack.c.l.b16 %v108
    %v556 = vunpack.c.h.b16 %v108
    %v557 = vunpack.c.l.b16 %v109
    %v558 = vunpack.c.h.b16 %v109
    %v559 = vunpack.c.l.b16 %v110
    %v560 = vunpack.c.h.b16 %v110
    %v561 = vunpack.c.l.b16 %v111
    %v562 = vunpack.c.h.b16 %v111
    %v563 = vunpack.c.l.b16 %v112
    %v564 = vunpack.c.h.b16 %v112
    %v565 = vunpack.c.l.b16 %v113
    %v566 = vunpack.c.h.b16 %v113
    %v567 = vunpack.c.l.b16 %v114
    %v568 = vunpack.c.h.b16 %v114
    %v569 = vunpack.c.l.b16 %v115
    %v570 = vunpack.c.h.b16 %v115
    %v571 = vunpack.c.l.b16 %v116
    %v572 = vunpack.c.h.b16 %v116
    %v573 = vunpack.c.l.b16 %v117
    %v574 = vunpack.c.h.b16 %v117
    %v575 = vunpack.c.l.b16 %v118
    %v576 = vunpack.c.h.b16 %v118
    %v577 = vunpack.c.l.b16 %v119
    %v578 = vunpack.c.h.b16 %v119
    %v579 = vunpack.c.l.b16 %v120
    %v580 = vunpack.c.h.b16 %v120
    %v581 = vunpack.c.l.b16 %v121
    %v582 = vunpack.c.h.b16 %v121
    %v583 = vunpack.c.l.b16 %v122
    %v584 = vunpack.c.h.b16 %v122
    %v585 = vunpack.c.l.b16 %v123
    %v586 = vunpack.c.h.b16 %v123
    %v587 = vunpack.c.l.b16 %v124
    %v588 = vunpack.c.h.b16 %v124
    %v589 = vunpack.c.l.b16 %v125
    %v590 = vunpack.c.h.b16 %v125
    %v591 = vunpack.c.l.b16 %v126
    %v592 = vunpack.c.h.b16 %v126
    %v593 = vunpack.c.l.b16 %v127
    %v594 = vunpack.c.h.b16 %v127
    %v595 = vunpack.c.l.b16 %v128
    %v596 = vunpack.c.h.b16 %v128
    %v597 = vunpack.c.l.b16 %v129
    %v598 = vunpack.c.h.b16 %v129
    %v599 = vunpack.c.l.b16 %v130
    %v600 = vunpack.c.h.b16 %v130
    %v601 = vunpack.c.l.b16 %v131
    %v602 = vunpack.c.h.b16 %v131
    %v603 = vunpack.c.l.b16 %v132
    %v604 = vunpack.c.h.b16 %v132
    %v605 = vunpack.c.l.b16 %v133
    %v606 = vunpack.c.h.b16 %v133
    %v607 = vunpack.c.l.b16 %v134
    %v608 = vunpack.c.h.b16 %v134
    %v609 = vunpack.c.l.b16 %v135
    %v610 = vunpack.c.h.b16 %v135
    %v611 = vunpack.c.l.b16 %v136
    %v612 = vunpack.c.h.b16 %v136
    %v613 = vunpack.c.l.b16 %v137
    %v614 = vunpack.c.h.b16 %v137
    %v615 = vunpack.c.l.b16 %v138
    %v616 = vunpack.c.h.b16 %v138
    %v617 = vunpack.c.l.b16 %v139
    %v618 = vunpack.c.h.b16 %v139
    %v619 = vunpack.c.l.b16 %v140
    %v620 = vunpack.c.h.b16 %v140
    %v621 = vunpack.c.l.b16 %v141
    %v622 = vunpack.c.h.b16 %v141
    %v623 = vunpack.c.l.b16 %v142
    %v624 = vunpack.c.h.b16 %v142
    %v625 = vunpack.c.l.b16 %v143
    %v626 = vunpack.c.h.b16 %v143
    %v627 = vunpack.c.l.b16 %v144
    %v628 = vunpack.c.h.b16 %v144
    %v629 = vunpack.c.l.b16 %v145
    %v630 = vunpack.c.h.b16 %v145
    %v631 = vunpack.c.l.b16 %v146
    %v632 = vunpack.c.h.b16 %v146
    %v633 = vunpack.c.l.b16 %v147
    %v634 = vunpack.c.h.b16 %v147
    %v635 = vunpack.c.l.b16 %v148
    %v636 = vunpack.c.h.b16 %v148
    %v637 = vunpack.c.l.b16 %v149
    %v638 = vunpack.c.h.b16 %v149
    %v639 = vunpack.c.l.b16 %v150
    %v640 = vunpack.c.h.b16 %v150
    %v641 = vunpack.c.l.b16 %v151
    %v642 = vunpack.c.h.b16 %v151
    %v643 = vunpack.c.l.b16 %v152
    %v644 = vunpack.c.h.b16 %v152
    %v645 = vunpack.c.l.b16 %v153
    %v646 = vunpack.c.h.b16 %v153
    %v647 = vunpack.c.l.b16 %v154
    %v648 = vunpack.c.h.b16 %v154
    %v649 = vunpack.c.l.b16 %v155
    %v650 = vunpack.c.h.b16 %v155
    %v651 = vunpack.c.l.b16 %v156
    %v652 = vunpack.c.h.b16 %v156
    %v653 = vunpack.c.l.b16 %v157
    %v654 = vunpack.c.h.b16 %v157
    %v655 = vunpack.c.l.b16 %v158
    %v656 = vunpack.c.h.b16 %v158
    %v657 = vunpack.c.l.b16 %v159
    %v658 = vunpack.c.h.b16 %v159
    %v659 = vunpack.c.l.b16 %v160
    %v660 = vunpack.c.h.b16 %v160
    %v661 = vunpack.c.l.b16 %v161
    %v662 = vunpack.c.h.b16 %v161
    %v663 = vunpack.c.l.b16 %v162
    %v664 = vunpack.c.h.b16 %v162
    %v665 = vunpack.c.l.b16 %v163
    %v666 = vunpack.c.h.b16 %v163
    %v667 = vunpack.c.l.b16 %v164
    %v668 = vunpack.c.h.b16 %v164
    %v669 = vunpack.c.l.b16 %v165
    %v670 = vunpack.c.h.b16 %v165
    %v671 = vunpack.c.l.b16 %v166
    %v672 = vunpack.c.h.b16 %v166
    %v673 = vunpack.c.l.b16 %v167
    %v674 = vunpack.c.h.b16 %v167
    %v675 = vunpack.c.l.b16 %v168
    %v676 = vunpack.c.h.b16 %v168
    %v677 = vunpack.c.l.b16 %v169
    %v678 = vunpack.c.h.b16 %v169
    %v679 = vunpack.c.l.b16 %v170
    %v680 = vunpack.c.h.b16 %v170
    %v681 = vunpack.c.l.b16 %v171
    %v682 = vunpack.c.h.b16 %v171
    %v683 = vunpack.c.l.b16 %v172
    %v684 = vunpack.c.h.b16 %v172
    %v685 = vunpack.c.l.b16 %v173
    %v686 = vunpack.c.h.b16 %v173
    %v687 = vunpack.c.l.b16 %v174
    %v688 = vunpack.c.h.b16 %v174
    %v689 = vunpack.c.l.b16 %v175
    %v690 = vunpack.c.h.b16 %v175
    %v691 = vunpack.c.l.b16 %v176
    %v692 = vunpack.c.h.b16 %v176
    %v693 = vunpack.c.l.b16 %v177
    %v694 = vunpack.c.h.b16 %v177
    %v695 = vunpack.c.l.b16 %v178
    %v696 = vunpack.c.h.b16 %v178
    %v697 = vunpack.c.l.b16 %v179
    %v698 = vunpack.c.h.b16 %v179
    %v699 = vunpack.c.l.b16 %v180
    %v700 = vunpack.c.h.b16 %v180
    %v701 = vunpack.c.l.b16 %v181
    %v702 = vunpack.c.h.b16 %v181
    %v703 = vunpack.c.l.b16 %v182
    %v704 = vunpack.c.h.b16 %v182
    %v705 = vunpack.c.l.b16 %v183
    %v706 = vunpack.c.h.b16 %v183
    %v707 = vunpack.c.l.b16 %v184
    %v708 = vunpack.c.h.b16 %v184
    %v709 = vunpack.c.l.b16 %v185
    %v710 = vunpack.c.h.b16 %v185
    %v711 = vunpack.c.l.b16 %v186
    %v712 = vunpack.c.h.b16 %v186
    %v713 = vunpack.c.l.b16 %v187
    %v714 = vunpack.c.h.b16 %v187
    %v715 = vunpack.c.l.b16 %v188
    %v716 = vunpack.c.h.b16 %v188
    %v717 = vunpack.c.l.b16 %v189
    %v718 = vunpack.c.h.b16 %v189
    %v719 = vunpack.c.l.b16 %v190
    %v720 = vunpack.c.h.b16 %v190
    %v721 = vunpack.c.l.b16 %v191
    %v722 = vunpack.c.h.b16 %v191
    %v723 = vunpack.c.l.b16 %v192
    %v724 = vunpack.c.h.b16 %v192
    %v725 = vunpack.c.l.b16 %v193
    %v726 = vunpack.c.h.b16 %v193
    %v727 = vunpack.c.l.b16 %v194
    %v728 = vunpack.c.h.b16 %v194
    %v729 = vunpack.c.l.b16 %v195
    %v730 = vunpack.c.h.b16 %v195
    %v731 = vunpack.c.l.b16 %v196
    %v732 = vunpack.c.h.b16 %v196
    %v733 = vunpack.c.l.b16 %v197
    %v734 = vunpack.c.h.b16 %v197
    %v735 = vunpack.c.l.b16 %v198
    %v736 = vunpack.c.h.b16 %v198
    %v737 = vunpack.c.l.b16 %v199
    %v738 = vunpack.c.h.b16 %v199
    %v739 = vunpack.c.l.b16 %v200
    %v740 = vunpack.c.h.b16 %v200
    %v741 = vunpack.c.l.b16 %v201
    %v742 = vunpack.c.h.b16 %v201
    %v743 = vunpack.c.l.b16 %v202
    %v744 = vunpack.c.h.b16 %v202
    %v745 = vunpack.c.l.b16 %v203
    %v746 = vunpack.c.h.b16 %v203
    %v747 = vunpack.c.l.b16 %v204
    %v748 = vunpack.c.h.b16 %v204
    %v749 = vunpack.c.l.b16 %v205
    %v750 = vunpack.c.h.b16 %v205
    %v751 = vunpack.c.l.b16 %v206
    %v752 = vunpack.c.h.b16 %v206
    %v753 = vunpack.c.l.b16 %v207
    %v754 = vunpack.c.h.b16 %v207
    %v755 = vunpack.c.l.b16 %v208
    %v756 = vunpack.c.h.b16 %v208
    %v757 = vunpack.c.l.b16 %v209
    %v758 = vunpack.c.h.b16 %v209
    %v759 = vunpack.c.l.b16 %v210
    %v760 = vunpack.c.h.b16 %v210
    %v761 = vunpack.c.l.b16 %v211
    %v762 = vunpack.c.h.b16 %v211
    %v763 = vunpack.c.l.b16 %v212
    %v764 = vunpack.c.h.b16 %v212
    %v765 = vunpack.c.l.b16 %v213
    %v766 = vunpack.c.h.b16 %v213
    %v767 = vunpack.c.l.b16 %v214
    %v768 = vunpack.c.h.b16 %v214
    %v769 = vunpack.c.l.b16 %v215
    %v770 = vunpack.c.h.b16 %v215
    %v771 = vunpack.c.l.b16 %v216
    %v772 = vunpack.c.h.b16 %v216
    %v773 = vunpack.c.l.b16 %v217
    %v774 = vunpack.c.h.b16 %v217
    %v775 = vunpack.c.l.b16 %v218
    %v776 = vunpack.c.h.b16 %v218
    %v777 = vunpack.c.l.b16 %v219
    %v778 = vunpack.c.h.b16 %v219
    %v779 = vunpack.c.l.b16 %v220
    %v780 = vunpack.c.h.b16 %v220
    %v781 = vunpack.c.l.b16 %v221
    %v782 = vunpack.c.h.b16 %v221
    %v783 = vunpack.c.l.b16 %v222
    %v784 = vunpack.c.h.b16 %v222
    %v785 = vunpack.c.l.b16 %v223
    %v786 = vunpack.c.h.b16 %v223
    %v787 = vunpack.c.l.b16 %v224
    %v788 = vunpack.c.h.b16 %v224
    %v789 = vunpack.c.l.b16 %v225
    %v790 = vunpack.c.h.b16 %v225
    %v791 = vunpack.c.l.b16 %v226
    %v792 = vunpack.c.h.b16 %v226
    %v793 = vunpack.c.l.b16 %v227
    %v794 = vunpack.c.h.b16 %v227
    %v795 = vunpack.c.l.b16 %v228
    %v796 = vunpack.c.h.b16 %v228
    %v797 = vunpack.c.l.b16 %v229
    %v798 = vunpack.c.h.b16 %v229
    %v799 = vunpack.c.l.b16 %v230
    %v800 = vunpack.c.h.b16 %v230
    %v801 = vunpack.c.l.b16 %v231
    %v802 = vunpack.c.h.b16 %v231
    %v803 = vunpack.c.l.b16 %v232
    %v804 = vunpack.c.h.b16 %v232
    %v805 = vunpack.c.l.b16 %v233
    %v806 = vunpack.c.h.b16 %v233
    %v807 = vunpack.c.l.b16 %v234
    %v808 = vunpack.c.h.b16 %v234
    %v809 = vunpack.c.l.b16 %v235
    %v810 = vunpack.c.h.b16 %v235
    %v811 = vunpack.c.l.b16 %v236
    %v812 = vunpack.c.h.b16 %v236
    %v813 = vunpack.c.l.b16 %v237
    %v814 = vunpack.c.h.b16 %v237
    %v815 = vunpack.c.l.b16 %v238
    %v816 = vunpack.c.h.b16 %v238
    %v817 = vunpack.c.l.b16 %v239
    %v818 = vunpack.c.h.b16 %v239
    %v819 = vunpack.c.l.b16 %v240
    %v820 = vunpack.c.h.b16 %v240
    %v821 = vunpack.c.l.b16 %v241
    %v822 = vunpack.c.h.b16 %v241
    %v823 = vunpack.c.l.b16 %v242
    %v824 = vunpack.c.h.b16 %v242
    %v825 = vunpack.c.l.b16 %v243
    %v826 = vunpack.c.h.b16 %v243
    %v827 = vunpack.c.l.b16 %v244
    %v828 = vunpack.c.h.b16 %v244
    %v829 = vunpack.c.l.b16 %v245
    %v830 = vunpack.c.h.b16 %v245
    %v831 = vunpack.c.l.b16 %v246
    %v832 = vunpack.c.h.b16 %v246
    %v833 = vunpack.c.l.b16 %v247
    %v834 = vunpack.c.h.b16 %v247
    %v835 = vunpack.c.l.b16 %v248
    %v836 = vunpack.c.h.b16 %v248
    %v837 = vunpack.c.l.b16 %v249
    %v838 = vunpack.c.h.b16 %v249
    %v839 = vunpack.c.l.b16 %v250
    %v840 = vunpack.c.h.b16 %v250
    %v841 = vunpack.c.l.b16 %v251
    %v842 = vunpack.c.h.b16 %v251
    %v843 = vunpack.c.l.b16 %v252
    %v844 = vunpack.c.h.b16 %v252
    %v845 = vunpack.c.l.b16 %v253
    %v846 = vunpack.c.h.b16 %v253
    %v847 = vunpack.c.l.b16 %v254
    %v848 = vunpack.c.h.b16 %v254
    %v849 = vunpack.c.l.b16 %v255
    %v850 = vunpack.c.h.b16 %v255
    %v851 = vunpack.c.l.b16 %v256
    %v852 = vunpack.c.h.b16 %v256
    %v853 = vunpack.c.l.b16 %v257
    %v854 = vunpack.c.h.b16 %v257
    %v855 = vunpack.c.l.b16 %v258
    %v856 = vunpack.c.h.b16 %v258
    %v857 = vunpack.c.l.b16 %v259
    %v858 = vunpack.c.h.b16 %v259
    %v859 = vunpack.c.l.b16 %v260
    %v860 = vunpack.c.h.b16 %v260
    %v861 = vunpack.c.l.b16 %v261
    %v862 = vunpack.c.h.b16 %v261
    %v863 = vunpack.c.l.b16 %v262
    %v864 = vunpack.c.h.b16 %v262
    %v865 = vunpack.c.l.b16 %v263
    %v866 = vunpack.c.h.b16 %v263
    %v867 = vunpack.c.l.b16 %v264
    %v868 = vunpack.c.h.b16 %v264
    %v869 = vunpack.c.l.b16 %v265
    %v870 = vunpack.c.h.b16 %v265
    %v871 = vunpack.c.l.b16 %v266
    %v872 = vunpack.c.h.b16 %v266
    %v873 = vunpack.c.l.b16 %v267
    %v874 = vunpack.c.h.b16 %v267
    %v875 = vunpack.c.l.b16 %v268
    %v876 = vunpack.c.h.b16 %v268
    %v877 = vunpack.c.l.b16 %v269
    %v878 = vunpack.c.h.b16 %v269
    %v879 = vunpack.c.l.b16 %v270
    %v880 = vunpack.c.h.b16 %v270
    %v881 = vpack.c.b16 %v493, %v489
    %v882 = vpack.c.b16 %v494, %v490
    %v883 = vpack.c.b16 %v495, %v491
    %v884 = vpack.c.b16 %v496, %v492
    %v885 = vpack.c.b16 %v501, %v497
    %v886 = vpack.c.b16 %v502, %v498
    %v887 = vpack.c.b16 %v503, %v499
    %v888 = vpack.c.b16 %v504, %v500
    %v889 = vpack.c.b16 %v509, %v505
    %v890 = vpack.c.b16 %v510, %v506
    %v891 = vpack.c.b16 %v511, %v507
    %v892 = vpack.c.b16 %v512, %v508
    %v893 = vpack.c.b16 %v517, %v513
    %v894 = vpack.c.b16 %v518, %v514
    %v895 = vpack.c.b16 %v519, %v515
    %v896 = vpack.c.b16 %v520, %v516
    %v897 = vpack.c.b16 %v525, %v521
    %v898 = vpack.c.b16 %v526, %v522
    %v899 = vpack.c.b16 %v527, %v523
    %v900 = vpack.c.b16 %v528, %v524
    %v901 = vpack.c.b16 %v533, %v529
    %v902 = vpack.c.b16 %v534, %v530
    %v903 = vpack.c.b16 %v535, %v531
    %v904 = vpack.c.b16 %v536, %v532
    %v905 = vpack.c.b16 %v541, %v537
    %v906 = vpack.c.b16 %v542, %v538
    %v907 = vpack.c.b16 %v543, %v539
    %v908 = vpack.c.b16 %v544, %v540
    %v909 = vpack.c.b16 %v549, %v545
    %v910 = vpack.c.b16 %v550, %v546
    %v911 = vpack.c.b16 %v551, %v547
    %v912 = vpack.c.b16 %v552, %v548
    %v913 = vpack.c.b16 %v557, %v553
    %v914 = vpack.c.b16 %v558, %v554
    %v915 = vpack.c.b16 %v559, %v555
    %v916 = vpack.c.b16 %v560, %v556
    %v917 = vpack.c.b16 %v565, %v561
    %v918 = vpack.c.b16 %v566, %v562
    %v919 = vpack.c.b16 %v567, %v563
    %v920 = vpack.c.b16 %v568, %v564
    %v921 = vpack.c.b16 %v573, %v569
    %v922 = vpack.c.b16 %v574, %v570
    %v923 = vpack.c.b16 %v575, %v571
    %v924 = vpack.c.b16 %v576, %v572
    %v925 = vpack.c.b16 %v581, %v577
    %v926 = vpack.c.b16 %v582, %v578
    %v927 = vpack.c.b16 %v583, %v579
    %v928 = vpack.c.b16 %v584, %v580
    %v929 = vpack.c.b16 %v589, %v585
    %v930 = vpack.c.b16 %v590, %v586
    %v931 = vpack.c.b16 %v591, %v587
    %v932 = vpack.c.b16 %v592, %v588
    %v933 = vpack.c.b16 %v597, %v593
    %v934 = vpack.c.b16 %v598, %v594
    %v935 = vpack.c.b16 %v599, %v595
    %v936 = vpack.c.b16 %v600, %v596
    %v937 = vpack.c.b16 %v605, %v601
    %v938 = vpack.c.b16 %v606, %v602
    %v939 = vpack.c.b16 %v607, %v603
    %v940 = vpack.c.b16 %v608, %v604
    %v941 = vpack.c.b16 %v613, %v609
    %v942 = vpack.c.b16 %v614, %v610
    %v943 = vpack.c.b16 %v615, %v611
    %v944 = vpack.c.b16 %v616, %v612
    %v945 = vpack.c.b16 %v621, %v617
    %v946 = vpack.c.b16 %v622, %v618
    %v947 = vpack.c.b16 %v623, %v619
    %v948 = vpack.c.b16 %v624, %v620
    %v949 = vpack.c.b16 %v629, %v625
    %v950 = vpack.c.b16 %v630, %v626
    %v951 = vpack.c.b16 %v631, %v627
    %v952 = vpack.c.b16 %v632, %v628
    %v953 = vpack.c.b16 %v637, %v633
    %v954 = vpack.c.b16 %v638, %v634
    %v955 = vpack.c.b16 %v639, %v635
    %v956 = vpack.c.b16 %v640, %v636
    %v957 = vpack.c.b16 %v645, %v641
    %v958 = vpack.c.b16 %v646, %v642
    %v959 = vpack.c.b16 %v647, %v643
    %v960 = vpack.c.b16 %v648, %v644
    %v961 = vpack.c.b16 %v653, %v649
    %v962 = vpack.c.b16 %v654, %v650
    %v963 = vpack.c.b16 %v655, %v651
    %v964 = vpack.c.b16 %v656, %v652
    %v965 = vpack.c.b16 %v661, %v657
    %v966 = vpack.c.b16 %v662, %v658
    %v967 = vpack.c.b16 %v663, %v659
    %v968 = vpack.c.b16 %v664, %v660
    %v969 = vpack.c.b16 %v669, %v665
    %v970 = vpack.c.b16 %v670, %v666
    %v971 = vpack.c.b16 %v671, %v667
    %v972 = vpack.c.b16 %v672, %v668
    %v973 = vpack.c.b16 %v677, %v673
    %v974 = vpack.c.b16 %v678, %v674
    %v975 = vpack.c.b16 %v679, %v675
    %v976 = vpack.c.b16 %v680, %v676
    %v977 = vpack.c.b16 %v685, %v681
    %v978 = vpack.c.b16 %v686, %v682
    %v979 = vpack.c.b16 %v687, %v683
    %v980 = vpack.c.b16 %v688, %v684
    %v981 = vpack.c.b16 %v693, %v689
    %v982 = vpack.c.b16 %v694, %v690
    %v983 = vpack.c.b16 %v695, %v691
    %v984 = vpack.c.b16 %v696, %v692
    %v985 = vpack.c.b16 %v701, %v697
    %v986 = vpack.c.b16 %v702, %v698
    %v987 = vpack.c.b16 %v703, %v699
    %v988 = vpack.c.b16 %v704, %v700
    %v989 = vpack.c.b16 %v709, %v705
    %v990 = vpack.c.b16 %v710, %v706
    %v991 = vpack.c.b16 %v711, %v707
    %v992 = vpack.c.b16 %v712, %v708
    %v993 = vpack.c.b16 %v717, %v713
    %v994 = vpack.c.b16 %v718, %v714
    %v995 = vpack.c.b16 %v719, %v715
    %v996 = vpack.c.b16 %v720, %v716
    %v997 = vpack.c.b16 %v725, %v721
    %v998 = vpack.c.b16 %v726, %v722
    %v999 = vpack.c.b16 %v727, %v723
    %v1000 = vpack.c.b16 %v728, %v724
    %v1001 = vpack.c.b16 %v733, %v729
    %v1002 = vpack.c.b16 %v734, %v730
    %v1003 = vpack.c.b16 %v735, %v731
    %v1004 = vpack.c.b16 %v736, %v732
    %v1005 = vpack.c.b16 %v741, %v737
    %v1006 = vpack.c.b16 %v742, %v738
    %v1007 = vpack.c.b16 %v743, %v739
    %v1008 = vpack.c.b16 %v744, %v740
    %v1009 = vpack.c.b16 %v749, %v745
    %v1010 = vpack.c.b16 %v750, %v746
    %v1011 = vpack.c.b16 %v751, %v747
    %v1012 = vpack.c.b16 %v752, %v748
    %v1013 = vpack.c.b16 %v757, %v753
    %v1014 = vpack.c.b16 %v758, %v754
    %v1015 = vpack.c.b16 %v759, %v755
    %v1016 = vpack.c.b16 %v760, %v756
    %v1017 = vpack.c.b16 %v765, %v761
    %v1018 = vpack.c.b16 %v766, %v762
    %v1019 = vpack.c.b16 %v767, %v763
    %v1020 = vpack.c.b16 %v768, %v764
    %v1021 = vpack.c.b16 %v773, %v769
    %v1022 = vpack.c.b16 %v774, %v770
    %v1023 = vpack.c.b16 %v775, %v771
    %v1024 = vpack.c.b16 %v776, %v772
    %v1025 = vpack.c.b16 %v781, %v777
    %v1026 = vpack.c.b16 %v782, %v778
    %v1027 = vpack.c.b16 %v783, %v779
    %v1028 = vpack.c.b16 %v784, %v780
    %v1029 = vpack.c.b16 %v789, %v785
    %v1030 = vpack.c.b16 %v790, %v786
    %v1031 = vpack.c.b16 %v791, %v787
    %v1032 = vpack.c.b16 %v792, %v788
    %v1033 = vpack.c.b16 %v797, %v793
    %v1034 = vpack.c.b16 %v798, %v794
    %v1035 = vpack.c.b16 %v799, %v795
    %v1036 = vpack.c.b16 %v800, %v796
    %v1037 = vpack.c.b16 %v805, %v801
    %v1038 = vpack.c.b16 %v806, %v802
    %v1039 = vpack.c.b16 %v807, %v803
    %v1040 = vpack.c.b16 %v808, %v804
    %v1041 = vpack.c.b16 %v813, %v809
    %v1042 = vpack.c.b16 %v814, %v810
    %v1043 = vpack.c.b16 %v815, %v811
    %v1044 = vpack.c.b16 %v816, %v812
    %v1045 = vpack.c.b16 %v821, %v817
    %v1046 = vpack.c.b16 %v822, %v818
    %v1047 = vpack.c.b16 %v823, %v819
    %v1048 = vpack.c.b16 %v824, %v820
    %v1049 = vpack.c.b16 %v829, %v825
    %v1050 = vpack.c.b16 %v830, %v826
    %v1051 = vpack.c.b16 %v831, %v827
    %v1052 = vpack.c.b16 %v832, %v828
    %v1053 = vpack.c.b16 %v837, %v833
    %v1054 = vpack.c.b16 %v838, %v834
    %v1055 = vpack.c.b16 %v839, %v835
    %v1056 = vpack.c.b16 %v840, %v836
    %v1057 = vpack.c.b16 %v845, %v841
    %v1058 = vpack.c.b16 %v846, %v842
    %v1059 = vpack.c.b16 %v847, %v843
    %v1060 = vpack.c.b16 %v848, %v844
    %v1061 = vpack.c.b16 %v853, %v849
    %v1062 = vpack.c.b16 %v854, %v850
    %v1063 = vpack.c.b16 %v855, %v851
    %v1064 = vpack.c.b16 %v856, %v852
    %v1065 = vpack.c.b16 %v861, %v857
    %v1066 = vpack.c.b16 %v862, %v858
    %v1067 = vpack.c.b16 %v863, %v859
    %v1068 = vpack.c.b16 %v864, %v860
    %v1069 = vpack.c.b16 %v869, %v865
    %v1070 = vpack.c.b16 %v870, %v866
    %v1071 = vpack.c.b16 %v871, %v867
    %v1072 = vpack.c.b16 %v872, %v868
    %v1073 = vpack.c.b16 %v877, %v873
    %v1074 = vpack.c.b16 %v878, %v874
    %v1075 = vpack.c.b16 %v879, %v875
    %v1076 = vpack.c.b16 %v880, %v876
    %vm1273 = vcmask 130048
    %v1275 = vsel %vm1273, %v74, 0
    %1277 = vmatprep.subr.bf16.mxu0 %v882
    %1278 = vmatpush1.bf16.msra.mxu0 %v881
    %1279 = vmatprep.subr.bf16.mxu0 %v886
    %1280 = vmatpush1.bf16.msra.mxu0 %v885
    %1281 = vmatprep.subr.bf16.mxu0 %v890
    %1282 = vmatpush1.bf16.msra.mxu0 %v889
    %1283 = vmatprep.subr.bf16.mxu0 %v894
    %1284 = vmatpush1.bf16.msra.mxu0 %v893
    %1285 = vmatprep.subr.bf16.mxu0 %v898
    %1286 = vmatpush1.bf16.msra.mxu0 %v897
    %1287 = vmatprep.subr.bf16.mxu0 %v902
    %1288 = vmatpush1.bf16.msra.mxu0 %v901
    %1289 = vmatprep.subr.bf16.mxu0 %v906
    %1290 = vmatpush1.bf16.msra.mxu0 %v905
    %1291 = vmatprep.subr.bf16.mxu0 %v910
    %1292 = vmatpush1.bf16.msra.mxu0 %v909
    %1293 = vmatprep.subr.bf16.mxu0 %v914
    %1294 = vmatpush1.bf16.msra.mxu0 %v913
    %1295 = vmatprep.subr.bf16.mxu0 %v918
    %1296 = vmatpush1.bf16.msra.mxu0 %v917
    %1297 = vmatprep.subr.bf16.mxu0 %v922
    %1298 = vmatpush1.bf16.msra.mxu0 %v921
    %1299 = vmatprep.subr.bf16.mxu0 %v926
    %1300 = vmatpush1.bf16.msra.mxu0 %v925
    %1301 = vmatprep.subr.bf16.mxu0 %v930
    %1302 = vmatpush1.bf16.msra.mxu0 %v929
    %1303 = vmatprep.subr.bf16.mxu0 %v934
    %1304 = vmatpush1.bf16.msra.mxu0 %v933
    %1305 = vmatprep.subr.bf16.mxu0 %v938
    %1306 = vmatpush1.bf16.msra.mxu0 %v937
    %1307 = vmatprep.subr.bf16.mxu0 %v942
    %1308 = vmatpush1.bf16.msra.mxu0 %v941
    %1309 = vmatprep.mubr.bf16.mxu0 %v69
    %1310 = vmatmul.mubr.bf16.gmra.mrb[0].mxu0 %v68
    %v1311 = vpop.f32.mrb[0].mxu0
    %v1312 = vadd.f32 %v276, %v1311
    %v1313 = vpop.f32.mrb[0].mxu0
    %v1314 = vadd.f32 %v280, %v1313
    %v1315 = vpop.f32.mrb[0].mxu0
    %v1316 = vpop.f32.mrb[0].mxu0
    %1317 = vdwg.mxu0
    %1318 = vmatprep.subr.bf16.mxu0 %v946
    %1319 = vmatpush1.bf16.msra.mxu0 %v945
    %1320 = vmatprep.subr.bf16.mxu0 %v950
    %1321 = vmatpush1.bf16.msra.mxu0 %v949
    %1322 = vmatprep.subr.bf16.mxu0 %v954
    %1323 = vmatpush1.bf16.msra.mxu0 %v953
    %1324 = vmatprep.subr.bf16.mxu0 %v958
    %1325 = vmatpush1.bf16.msra.mxu0 %v957
    %1326 = vmatprep.subr.bf16.mxu0 %v962
    %1327 = vmatpush1.bf16.msra.mxu0 %v961
    %1328 = vmatprep.subr.bf16.mxu0 %v966
    %1329 = vmatpush1.bf16.msra.mxu0 %v965
    %1330 = vmatprep.subr.bf16.mxu0 %v970
    %1331 = vmatpush1.bf16.msra.mxu0 %v969
    %1332 = vmatprep.subr.bf16.mxu0 %v974
    %1333 = vmatpush1.bf16.msra.mxu0 %v973
    %1334 = vmatprep.subr.bf16.mxu0 %v978
    %1335 = vmatpush1.bf16.msra.mxu0 %v977
    %1336 = vmatprep.subr.bf16.mxu0 %v982
    %1337 = vmatpush1.bf16.msra.mxu0 %v981
    %1338 = vmatprep.subr.bf16.mxu0 %v986
    %1339 = vmatpush1.bf16.msra.mxu0 %v985
    %1340 = vmatprep.subr.bf16.mxu0 %v990
    %1341 = vmatpush1.bf16.msra.mxu0 %v989
    %1342 = vmatprep.subr.bf16.mxu0 %v994
    %1343 = vmatpush1.bf16.msra.mxu0 %v993
    %1344 = vmatprep.subr.bf16.mxu0 %v998
    %1345 = vmatpush1.bf16.msra.mxu0 %v997
    %1346 = vmatprep.subr.bf16.mxu0 %v1002
    %1347 = vmatpush1.bf16.msra.mxu0 %v1001
    %1348 = vmatprep.subr.bf16.mxu0 %v1006
    %1349 = vmatpush1.bf16.msra.mxu0 %v1005
    %1350 = vmatprep.mubr.bf16.mxu0 %v71
    %1351 = vmatmul.mubr.bf16.gmra.mrb[0].mxu0 %v70
    %v1352 = vpop.f32.mrb[0].mxu0
    %v1353 = vadd.f32 %v1312, %v1352
    %v1354 = vpop.f32.mrb[0].mxu0
    %v1355 = vadd.f32 %v1314, %v1354
    %v1356 = vpop.f32.mrb[0].mxu0
    %v1357 = vpop.f32.mrb[0].mxu0
    %1358 = vdwg.mxu0
    %1359 = vmatprep.subr.bf16.mxu0 %v1010
    %1360 = vmatpush1.bf16.msra.mxu0 %v1009
    %1361 = vmatprep.subr.bf16.mxu0 %v1014
    %1362 = vmatpush1.bf16.msra.mxu0 %v1013
    %1363 = vmatprep.subr.bf16.mxu0 %v1018
    %1364 = vmatpush1.bf16.msra.mxu0 %v1017
    %1365 = vmatprep.subr.bf16.mxu0 %v1022
    %1366 = vmatpush1.bf16.msra.mxu0 %v1021
    %1367 = vmatprep.subr.bf16.mxu0 %v1026
    %1368 = vmatpush1.bf16.msra.mxu0 %v1025
    %1369 = vmatprep.subr.bf16.mxu0 %v1030
    %1370 = vmatpush1.bf16.msra.mxu0 %v1029
    %1371 = vmatprep.subr.bf16.mxu0 %v1034
    %1372 = vmatpush1.bf16.msra.mxu0 %v1033
    %1373 = vmatprep.subr.bf16.mxu0 %v1038
    %1374 = vmatpush1.bf16.msra.mxu0 %v1037
    %1375 = vmatprep.subr.bf16.mxu0 %v1042
    %1376 = vmatpush1.bf16.msra.mxu0 %v1041
    %1377 = vmatprep.subr.bf16.mxu0 %v1046
    %1378 = vmatpush1.bf16.msra.mxu0 %v1045
    %1379 = vmatprep.subr.bf16.mxu0 %v1050
    %1380 = vmatpush1.bf16.msra.mxu0 %v1049
    %1381 = vmatprep.subr.bf16.mxu0 %v1054
    %1382 = vmatpush1.bf16.msra.mxu0 %v1053
    %1383 = vmatprep.subr.bf16.mxu0 %v1058
    %1384 = vmatpush1.bf16.msra.mxu0 %v1057
    %1385 = vmatprep.subr.bf16.mxu0 %v1062
    %1386 = vmatpush1.bf16.msra.mxu0 %v1061
    %1387 = vmatprep.subr.bf16.mxu0 %v1066
    %1388 = vmatpush1.bf16.msra.mxu0 %v1065
    %1389 = vmatprep.subr.bf16.mxu0 %v1070
    %1390 = vmatpush1.bf16.msra.mxu0 %v1069
    %1391 = vmatprep.mubr.bf16.mxu0 %v73
    %1392 = vmatmul.mubr.bf16.gmra.mrb[0].mxu0 %v72
    %v1393 = vpop.f32.mrb[0].mxu0
    %v1394 = vadd.f32 %v1353, %v1393
    %v1395 = vpop.f32.mrb[0].mxu0
    %v1396 = vadd.f32 %v1355, %v1395
    %v1397 = vpop.f32.mrb[0].mxu0
    %v1398 = vpop.f32.mrb[0].mxu0
    %1399 = vdwg.mxu0
    %1400 = vmatprep.subr.bf16.mxu0 %v1074
    %1401 = vmatpush1.bf16.msra.mxu0 %v1073
    %1402 = vmatprep.subr.bf16.mxu0 0
    %1403 = vmatpush1.bf16.msra.mxu0 0
    %1404 = vmatprep.subr.bf16.mxu0 0
    %1405 = vmatpush1.bf16.msra.mxu0 0
    %1406 = vmatprep.subr.bf16.mxu0 0
    %1407 = vmatpush1.bf16.msra.mxu0 0
    %1408 = vmatprep.subr.bf16.mxu0 0
    %1409 = vmatpush1.bf16.msra.mxu0 0
    %1410 = vmatprep.subr.bf16.mxu0 0
    %1411 = vmatpush1.bf16.msra.mxu0 0
    %1412 = vmatprep.subr.bf16.mxu0 0
    %1413 = vmatpush1.bf16.msra.mxu0 0
    %1414 = vmatprep.subr.bf16.mxu0 0
    %1415 = vmatpush1.bf16.msra.mxu0 0
    %1416 = vmatprep.subr.bf16.mxu0 0
    %1417 = vmatpush1.bf16.msra.mxu0 0
    %1418 = vmatprep.subr.bf16.mxu0 0
    %1419 = vmatpush1.bf16.msra.mxu0 0
    %1420 = vmatprep.subr.bf16.mxu0 0
    %1421 = vmatpush1.bf16.msra.mxu0 0
    %1422 = vmatprep.subr.bf16.mxu0 0
    %1423 = vmatpush1.bf16.msra.mxu0 0
    %1424 = vmatprep.subr.bf16.mxu0 0
    %1425 = vmatpush1.bf16.msra.mxu0 0
    %1426 = vmatprep.subr.bf16.mxu0 0
    %1427 = vmatpush1.bf16.msra.mxu0 0
    %1428 = vmatprep.subr.bf16.mxu0 0
    %1429 = vmatpush1.bf16.msra.mxu0 0
    %1430 = vmatprep.subr.bf16.mxu0 0
    %1431 = vmatpush1.bf16.msra.mxu0 0
    %1432 = vmatprep.mubr.bf16.mxu0 0
    %1433 = vmatmul.mubr.bf16.gmra.mrb[0].mxu0 %v1275
    %v1434 = vpop.f32.mrb[0].mxu0
    %v1435 = vadd.f32 %v1394, %v1434
    %v1436 = vpop.f32.mrb[0].mxu0
    %v1437 = vadd.f32 %v1396, %v1436
    %v1438 = vpop.f32.mrb[0].mxu0
    %v1439 = vpop.f32.mrb[0].mxu0
    %1440 = vdwg.mxu0
    %1441 = vmatprep.subr.bf16.mxu0 %v884
    %1442 = vmatpush1.bf16.msra.mxu0 %v883
    %1443 = vmatprep.subr.bf16.mxu0 %v888
    %1444 = vmatpush1.bf16.msra.mxu0 %v887
    %1445 = vmatprep.subr.bf16.mxu0 %v892
    %1446 = vmatpush1.bf16.msra.mxu0 %v891
    %1447 = vmatprep.subr.bf16.mxu0 %v896
    %1448 = vmatpush1.bf16.msra.mxu0 %v895
    %1449 = vmatprep.subr.bf16.mxu0 %v900
    %1450 = vmatpush1.bf16.msra.mxu0 %v899
    %1451 = vmatprep.subr.bf16.mxu0 %v904
    %1452 = vmatpush1.bf16.msra.mxu0 %v903
    %1453 = vmatprep.subr.bf16.mxu0 %v908
    %1454 = vmatpush1.bf16.msra.mxu0 %v907
    %1455 = vmatprep.subr.bf16.mxu0 %v912
    %1456 = vmatpush1.bf16.msra.mxu0 %v911
    %1457 = vmatprep.subr.bf16.mxu0 %v916
    %1458 = vmatpush1.bf16.msra.mxu0 %v915
    %1459 = vmatprep.subr.bf16.mxu0 %v920
    %1460 = vmatpush1.bf16.msra.mxu0 %v919
    %1461 = vmatprep.subr.bf16.mxu0 %v924
    %1462 = vmatpush1.bf16.msra.mxu0 %v923
    %1463 = vmatprep.subr.bf16.mxu0 %v928
    %1464 = vmatpush1.bf16.msra.mxu0 %v927
    %1465 = vmatprep.subr.bf16.mxu0 %v932
    %1466 = vmatpush1.bf16.msra.mxu0 %v931
    %1467 = vmatprep.subr.bf16.mxu0 %v936
    %1468 = vmatpush1.bf16.msra.mxu0 %v935
    %1469 = vmatprep.subr.bf16.mxu0 %v940
    %1470 = vmatpush1.bf16.msra.mxu0 %v939
    %1471 = vmatprep.subr.bf16.mxu0 %v944
    %1472 = vmatpush1.bf16.msra.mxu0 %v943
    %1473 = vmatprep.mubr.bf16.mxu0 %v69
    %1474 = vmatmul.mubr.bf16.gmra.mrb[0].mxu0 %v68
    %v1475 = vpop.f32.mrb[0].mxu0
    %v1476 = vadd.f32 %v284, %v1475
    %v1477 = vpop.f32.mrb[0].mxu0
    %v1478 = vadd.f32 %v288, %v1477
    %v1479 = vpop.f32.mrb[0].mxu0
    %v1480 = vpop.f32.mrb[0].mxu0
    %1481 = vdwg.mxu0
    %1482 = vmatprep.subr.bf16.mxu0 %v948
    %1483 = vmatpush1.bf16.msra.mxu0 %v947
    %1484 = vmatprep.subr.bf16.mxu0 %v952
    %1485 = vmatpush1.bf16.msra.mxu0 %v951
    %1486 = vmatprep.subr.bf16.mxu0 %v956
    %1487 = vmatpush1.bf16.msra.mxu0 %v955
    %1488 = vmatprep.subr.bf16.mxu0 %v960
    %1489 = vmatpush1.bf16.msra.mxu0 %v959
    %1490 = vmatprep.subr.bf16.mxu0 %v964
    %1491 = vmatpush1.bf16.msra.mxu0 %v963
    %1492 = vmatprep.subr.bf16.mxu0 %v968
    %1493 = vmatpush1.bf16.msra.mxu0 %v967
    %1494 = vmatprep.subr.bf16.mxu0 %v972
    %1495 = vmatpush1.bf16.msra.mxu0 %v971
    %1496 = vmatprep.subr.bf16.mxu0 %v976
    %1497 = vmatpush1.bf16.msra.mxu0 %v975
    %1498 = vmatprep.subr.bf16.mxu0 %v980
    %1499 = vmatpush1.bf16.msra.mxu0 %v979
    %1500 = vmatprep.subr.bf16.mxu0 %v984
    %1501 = vmatpush1.bf16.msra.mxu0 %v983
    %1502 = vmatprep.subr.bf16.mxu0 %v988
    %1503 = vmatpush1.bf16.msra.mxu0 %v987
    %1504 = vmatprep.subr.bf16.mxu0 %v992
    %1505 = vmatpush1.bf16.msra.mxu0 %v991
    %1506 = vmatprep.subr.bf16.mxu0 %v996
    %1507 = vmatpush1.bf16.msra.mxu0 %v995
    %1508 = vmatprep.subr.bf16.mxu0 %v1000
    %1509 = vmatpush1.bf16.msra.mxu0 %v999
    %1510 = vmatprep.subr.bf16.mxu0 %v1004
    %1511 = vmatpush1.bf16.msra.mxu0 %v1003
    %1512 = vmatprep.subr.bf16.mxu0 %v1008
    %1513 = vmatpush1.bf16.msra.mxu0 %v1007
    %1514 = vmatprep.mubr.bf16.mxu0 %v71
    %1515 = vmatmul.mubr.bf16.gmra.mrb[0].mxu0 %v70
    %v1516 = vpop.f32.mrb[0].mxu0
    %v1517 = vadd.f32 %v1476, %v1516
    %v1518 = vpop.f32.mrb[0].mxu0
    %v1519 = vadd.f32 %v1478, %v1518
    %v1520 = vpop.f32.mrb[0].mxu0
    %v1521 = vpop.f32.mrb[0].mxu0
    %1522 = vdwg.mxu0
    %1523 = vmatprep.subr.bf16.mxu0 %v1012
    %1524 = vmatpush1.bf16.msra.mxu0 %v1011
    %1525 = vmatprep.subr.bf16.mxu0 %v1016
    %1526 = vmatpush1.bf16.msra.mxu0 %v1015
    %1527 = vmatprep.subr.bf16.mxu0 %v1020
    %1528 = vmatpush1.bf16.msra.mxu0 %v1019
    %1529 = vmatprep.subr.bf16.mxu0 %v1024
    %1530 = vmatpush1.bf16.msra.mxu0 %v1023
    %1531 = vmatprep.subr.bf16.mxu0 %v1028
    %1532 = vmatpush1.bf16.msra.mxu0 %v1027
    %1533 = vmatprep.subr.bf16.mxu0 %v1032
    %1534 = vmatpush1.bf16.msra.mxu0 %v1031
    %1535 = vmatprep.subr.bf16.mxu0 %v1036
    %1536 = vmatpush1.bf16.msra.mxu0 %v1035
    %1537 = vmatprep.subr.bf16.mxu0 %v1040
    %1538 = vmatpush1.bf16.msra.mxu0 %v1039
    %1539 = vmatprep.subr.bf16.mxu0 %v1044
    %1540 = vmatpush1.bf16.msra.mxu0 %v1043
    %1541 = vmatprep.subr.bf16.mxu0 %v1048
    %1542 = vmatpush1.bf16.msra.mxu0 %v1047
    %1543 = vmatprep.subr.bf16.mxu0 %v1052
    %1544 = vmatpush1.bf16.msra.mxu0 %v1051
    %1545 = vmatprep.subr.bf16.mxu0 %v1056
    %1546 = vmatpush1.bf16.msra.mxu0 %v1055
    %1547 = vmatprep.subr.bf16.mxu0 %v1060
    %1548 = vmatpush1.bf16.msra.mxu0 %v1059
    %1549 = vmatprep.subr.bf16.mxu0 %v1064
    %1550 = vmatpush1.bf16.msra.mxu0 %v1063
    %1551 = vmatprep.subr.bf16.mxu0 %v1068
    %1552 = vmatpush1.bf16.msra.mxu0 %v1067
    %1553 = vmatprep.subr.bf16.mxu0 %v1072
    %1554 = vmatpush1.bf16.msra.mxu0 %v1071
    %1555 = vmatprep.mubr.bf16.mxu0 %v73
    %1556 = vmatmul.mubr.bf16.gmra.mrb[0].mxu0 %v72
    %v1557 = vpop.f32.mrb[0].mxu0
    %v1558 = vadd.f32 %v1517, %v1557
    %v1559 = vpop.f32.mrb[0].mxu0
    %v1560 = vadd.f32 %v1519, %v1559
    %v1561 = vpop.f32.mrb[0].mxu0
    %v1562 = vpop.f32.mrb[0].mxu0
    %1563 = vdwg.mxu0
    %1564 = vmatprep.subr.bf16.mxu0 %v1076
    %1565 = vmatpush1.bf16.msra.mxu0 %v1075
    %1566 = vmatprep.subr.bf16.mxu0 0
    %1567 = vmatpush1.bf16.msra.mxu0 0
    %1568 = vmatprep.subr.bf16.mxu0 0
    %1569 = vmatpush1.bf16.msra.mxu0 0
    %1570 = vmatprep.subr.bf16.mxu0 0
    %1571 = vmatpush1.bf16.msra.mxu0 0
    %1572 = vmatprep.subr.bf16.mxu0 0
    %1573 = vmatpush1.bf16.msra.mxu0 0
    %1574 = vmatprep.subr.bf16.mxu0 0
    %1575 = vmatpush1.bf16.msra.mxu0 0
    %1576 = vmatprep.subr.bf16.mxu0 0
    %1577 = vmatpush1.bf16.msra.mxu0 0
    %1578 = vmatprep.subr.bf16.mxu0 0
    %1579 = vmatpush1.bf16.msra.mxu0 0
    %1580 = vmatprep.subr.bf16.mxu0 0
    %1581 = vmatpush1.bf16.msra.mxu0 0
    %1582 = vmatprep.subr.bf16.mxu0 0
    %1583 = vmatpush1.bf16.msra.mxu0 0
    %1584 = vmatprep.subr.bf16.mxu0 0
    %1585 = vmatpush1.bf16.msra.mxu0 0
    %1586 = vmatprep.subr.bf16.mxu0 0
    %1587 = vmatpush1.bf16.msra.mxu0 0
    %1588 = vmatprep.subr.bf16.mxu0 0
    %1589 = vmatpush1.bf16.msra.mxu0 0
    %1590 = vmatprep.subr.bf16.mxu0 0
    %1591 = vmatpush1.bf16.msra.mxu0 0
    %1592 = vmatprep.subr.bf16.mxu0 0
    %1593 = vmatpush1.bf16.msra.mxu0 0
    %1594 = vmatprep.subr.bf16.mxu0 0
    %1595 = vmatpush1.bf16.msra.mxu0 0
    %1596 = vmatprep.mubr.bf16.mxu0 0
    %1597 = vmatmul.mubr.bf16.gmra.mrb[0].mxu0 %v1275
    %v1598 = vpop.f32.mrb[0].mxu0
    %v1599 = vadd.f32 %v1558, %v1598
    %v1600 = vpop.f32.mrb[0].mxu0
    %v1601 = vadd.f32 %v1560, %v1600
    %v1602 = vpop.f32.mrb[0].mxu0
    %v1603 = vpop.f32.mrb[0].mxu0
    %1604 = vdwg.mxu0
    %v1605 = vmax.f32 %v1435, 0.0
    %v1606 = vmax.f32 %v1437, 0.0
    %v1607 = vmax.f32 %v1599, 0.0
    %v1608 = vmax.f32 %v1601, 0.0
    %v1609 = vpack.c.bf16 %v1605, %v1605
    %v1610 = vpack.c.bf16 %v1606, %v1606
    %v1611 = vpack.c.bf16 %v1607, %v1607
    %v1612 = vpack.c.bf16 %v1608, %v1608
    %v1613 = vld [vmem:[#allocation7] sm:$0xf]
    %v1614 = vld [vmem:[#allocation7 + $0x4] sm:$0xf]
    %v1615 = vld [vmem:[#allocation7 + $0x8] sm:$0xf]
    %v1616 = vld [vmem:[#allocation7 + $0xc] sm:$0xf]
    %v1617 = vld [vmem:[#allocation7 + $0x10] sm:$0xf]
    %v1618 = vld [vmem:[#allocation7 + $0x14] sm:$0xf]
    %v1619 = vld [vmem:[#allocation7 + $0x18] sm:$0xf]
    %v1620 = vld [vmem:[#allocation7 + $0x1c] sm:$0xf]
    %v1621 = vld [vmem:[#allocation7 + $0x20] sm:$0xf]
    %v1622 = vld [vmem:[#allocation7 + $0x24] sm:$0xf]
    %v1623 = vld [vmem:[#allocation7 + $0x28] sm:$0xf]
    %v1624 = vld [vmem:[#allocation7 + $0x2c] sm:$0xf]
    %v1625 = vld [vmem:[#allocation7 + $0x30] sm:$0xf]
    %v1626 = vld [vmem:[#allocation7 + $0x34] sm:$0xf]
    %v1627 = vld [vmem:[#allocation7 + $0x38] sm:$0xf]
    %v1628 = vld [vmem:[#allocation7 + $0x3c] sm:$0xf]
    %v1629 = vld [vmem:[#allocation7 + $0x40] sm:$0xf]
    %v1630 = vld [vmem:[#allocation7 + $0x44] sm:$0xf]
    %v1631 = vld [vmem:[#allocation7 + $0x48] sm:$0xf]
    %v1632 = vld [vmem:[#allocation7 + $0x4c] sm:$0xf]
    %v1633 = vld [vmem:[#allocation7 + $0x50] sm:$0xf]
    %v1634 = vld [vmem:[#allocation7 + $0x54] sm:$0xf]
    %v1635 = vld [vmem:[#allocation7 + $0x58] sm:$0xf]
    %v1636 = vld [vmem:[#allocation7 + $0x5c] sm:$0xf]
    %v1637 = vld [vmem:[#allocation7 + $0x60] sm:$0xf]
    %v1638 = vld [vmem:[#allocation7 + $0x64] sm:$0xf]
    %v1639 = vld [vmem:[#allocation7 + $0x68] sm:$0xf]
    %v1640 = vld [vmem:[#allocation7 + $0x6c] sm:$0xf]
    %v1641 = vld [vmem:[#allocation7 + $0x70] sm:$0xf]
    %v1642 = vld [vmem:[#allocation7 + $0x74] sm:$0xf]
    %v1643 = vld [vmem:[#allocation7 + $0x78] sm:$0xf]
    %v1644 = vld [vmem:[#allocation7 + $0x7c] sm:$0xf]
    %v1645 = vld [vmem:[#allocation7 + $0x80] sm:$0xf]
    %v1646 = vld [vmem:[#allocation7 + $0x84] sm:$0xf]
    %v1647 = vld [vmem:[#allocation7 + $0x88] sm:$0xf]
    %v1648 = vld [vmem:[#allocation7 + $0x8c] sm:$0xf]
    %v1649 = vld [vmem:[#allocation7 + $0x90] sm:$0xf]
    %v1650 = vld [vmem:[#allocation7 + $0x94] sm:$0xf]
    %v1651 = vld [vmem:[#allocation7 + $0x98] sm:$0xf]
    %v1652 = vld [vmem:[#allocation7 + $0x9c] sm:$0xf]
    %v1653 = vld [vmem:[#allocation7 + $0xa0] sm:$0xf]
    %v1654 = vld [vmem:[#allocation7 + $0xa4] sm:$0xf]
    %v1655 = vld [vmem:[#allocation7 + $0xa8] sm:$0xf]
    %v1656 = vld [vmem:[#allocation7 + $0xac] sm:$0xf]
    %v1657 = vld [vmem:[#allocation7 + $0xb0] sm:$0xf]
    %v1658 = vld [vmem:[#allocation7 + $0xb4] sm:$0xf]
    %v1659 = vld [vmem:[#allocation7 + $0xb8] sm:$0xf]
    %v1660 = vld [vmem:[#allocation7 + $0xbc] sm:$0xf]
    %v1661 = vld [vmem:[#allocation7 + $0xc0] sm:$0xf]
    %v1662 = vld [vmem:[#allocation7 + $0xc4] sm:$0xf]
    %v1663 = vld [vmem:[#allocation7 + $0xc8] sm:$0xf]
    %v1664 = vld [vmem:[#allocation7 + $0xcc] sm:$0xf]
    %v1665 = vld [vmem:[#allocation7 + $0xd0] sm:$0xf]
    %v1666 = vld [vmem:[#allocation7 + $0xd4] sm:$0xf]
    %v1667 = vld [vmem:[#allocation7 + $0xd8] sm:$0xf]
    %v1668 = vld [vmem:[#allocation7 + $0xdc] sm:$0xf]
    %v1669 = vld [vmem:[#allocation7 + $0xe0] sm:$0xf]
    %v1670 = vld [vmem:[#allocation7 + $0xe4] sm:$0xf]
    %v1671 = vld [vmem:[#allocation7 + $0xe8] sm:$0xf]
    %v1672 = vld [vmem:[#allocation7 + $0xec] sm:$0xf]
    %v1673 = vld [vmem:[#allocation7 + $0xf0] sm:$0xf]
    %v1674 = vld [vmem:[#allocation7 + $0xf4] sm:$0xf]
    %v1675 = vld [vmem:[#allocation7 + $0xf8] sm:$0xf]
    %v1676 = vld [vmem:[#allocation7 + $0xfc] sm:$0xf]
    %v1677 = vld [vmem:[%s4] sm:$0x1]
    %v1679 = vlaneseq
    %v1680 = vshrl.u32 %v1679, 7
    %v1681 = vsub.s32 0, %v1680
    %v1682 = vrot.slane %v1677, %v1681
    %v1748 = vunpack.c.l.b16 %v1613
    %v1749 = vunpack.c.l.b16 %v1614
    %v1750 = vunpack.c.l.b16 %v1615
    %v1751 = vunpack.c.l.b16 %v1616
    %v1752 = vunpack.c.l.b16 %v1617
    %v1753 = vunpack.c.l.b16 %v1618
    %v1754 = vunpack.c.l.b16 %v1619
    %v1755 = vunpack.c.l.b16 %v1620
    %v1756 = vunpack.c.l.b16 %v1621
    %v1757 = vunpack.c.l.b16 %v1622
    %v1758 = vunpack.c.l.b16 %v1623
    %v1759 = vunpack.c.l.b16 %v1624
    %v1760 = vunpack.c.l.b16 %v1625
    %v1761 = vunpack.c.l.b16 %v1626
    %v1762 = vunpack.c.l.b16 %v1627
    %v1763 = vunpack.c.l.b16 %v1628
    %v1764 = vunpack.c.l.b16 %v1629
    %v1765 = vunpack.c.l.b16 %v1630
    %v1766 = vunpack.c.l.b16 %v1631
    %v1767 = vunpack.c.l.b16 %v1632
    %v1768 = vunpack.c.l.b16 %v1633
    %v1769 = vunpack.c.l.b16 %v1634
    %v1770 = vunpack.c.l.b16 %v1635
    %v1771 = vunpack.c.l.b16 %v1636
    %v1772 = vunpack.c.l.b16 %v1637
    %v1773 = vunpack.c.l.b16 %v1638
    %v1774 = vunpack.c.l.b16 %v1639
    %v1775 = vunpack.c.l.b16 %v1640
    %v1776 = vunpack.c.l.b16 %v1641
    %v1777 = vunpack.c.l.b16 %v1642
    %v1778 = vunpack.c.l.b16 %v1643
    %v1779 = vunpack.c.l.b16 %v1644
    %v1780 = vunpack.c.l.b16 %v1645
    %v1781 = vunpack.c.l.b16 %v1646
    %v1782 = vunpack.c.l.b16 %v1647
    %v1783 = vunpack.c.l.b16 %v1648
    %v1784 = vunpack.c.l.b16 %v1649
    %v1785 = vunpack.c.l.b16 %v1650
    %v1786 = vunpack.c.l.b16 %v1651
    %v1787 = vunpack.c.l.b16 %v1652
    %v1788 = vunpack.c.l.b16 %v1653
    %v1789 = vunpack.c.l.b16 %v1654
    %v1790 = vunpack.c.l.b16 %v1655
    %v1791 = vunpack.c.l.b16 %v1656
    %v1792 = vunpack.c.l.b16 %v1657
    %v1793 = vunpack.c.l.b16 %v1658
    %v1794 = vunpack.c.l.b16 %v1659
    %v1795 = vunpack.c.l.b16 %v1660
    %v1796 = vunpack.c.l.b16 %v1661
    %v1797 = vunpack.c.l.b16 %v1662
    %v1798 = vunpack.c.l.b16 %v1663
    %v1799 = vunpack.c.l.b16 %v1664
    %v1800 = vunpack.c.l.b16 %v1665
    %v1801 = vunpack.c.l.b16 %v1666
    %v1802 = vunpack.c.l.b16 %v1667
    %v1803 = vunpack.c.l.b16 %v1668
    %v1804 = vunpack.c.l.b16 %v1669
    %v1805 = vunpack.c.l.b16 %v1670
    %v1806 = vunpack.c.l.b16 %v1671
    %v1807 = vunpack.c.l.b16 %v1672
    %v1808 = vunpack.c.l.b16 %v1673
    %v1809 = vunpack.c.l.b16 %v1674
    %v1810 = vunpack.c.l.b16 %v1675
    %v1811 = vunpack.c.l.b16 %v1676
    %v1812 = vpack.c.b16 %v1749, %v1748
    %v1813 = vpack.c.b16 %v1751, %v1750
    %v1814 = vpack.c.b16 %v1753, %v1752
    %v1815 = vpack.c.b16 %v1755, %v1754
    %v1816 = vpack.c.b16 %v1757, %v1756
    %v1817 = vpack.c.b16 %v1759, %v1758
    %v1818 = vpack.c.b16 %v1761, %v1760
    %v1819 = vpack.c.b16 %v1763, %v1762
    %v1820 = vpack.c.b16 %v1765, %v1764
    %v1821 = vpack.c.b16 %v1767, %v1766
    %v1822 = vpack.c.b16 %v1769, %v1768
    %v1823 = vpack.c.b16 %v1771, %v1770
    %v1824 = vpack.c.b16 %v1773, %v1772
    %v1825 = vpack.c.b16 %v1775, %v1774
    %v1826 = vpack.c.b16 %v1777, %v1776
    %v1827 = vpack.c.b16 %v1779, %v1778
    %v1828 = vpack.c.b16 %v1781, %v1780
    %v1829 = vpack.c.b16 %v1783, %v1782
    %v1830 = vpack.c.b16 %v1785, %v1784
    %v1831 = vpack.c.b16 %v1787, %v1786
    %v1832 = vpack.c.b16 %v1789, %v1788
    %v1833 = vpack.c.b16 %v1791, %v1790
    %v1834 = vpack.c.b16 %v1793, %v1792
    %v1835 = vpack.c.b16 %v1795, %v1794
    %v1836 = vpack.c.b16 %v1797, %v1796
    %v1837 = vpack.c.b16 %v1799, %v1798
    %v1838 = vpack.c.b16 %v1801, %v1800
    %v1839 = vpack.c.b16 %v1803, %v1802
    %v1840 = vpack.c.b16 %v1805, %v1804
    %v1841 = vpack.c.b16 %v1807, %v1806
    %v1842 = vpack.c.b16 %v1809, %v1808
    %v1843 = vpack.c.b16 %v1811, %v1810
    %1876 = vmatprep.subr.bf16.mxu0 0
    %1877 = vmatpush1.bf16.msra.mxu0 %v1812
    %1878 = vmatprep.subr.bf16.mxu0 0
    %1879 = vmatpush1.bf16.msra.mxu0 %v1813
    %1880 = vmatprep.subr.bf16.mxu0 0
    %1881 = vmatpush1.bf16.msra.mxu0 %v1814
    %1882 = vmatprep.subr.bf16.mxu0 0
    %1883 = vmatpush1.bf16.msra.mxu0 %v1815
    %1884 = vmatprep.subr.bf16.mxu0 0
    %1885 = vmatpush1.bf16.msra.mxu0 %v1816
    %1886 = vmatprep.subr.bf16.mxu0 0
    %1887 = vmatpush1.bf16.msra.mxu0 %v1817
    %1888 = vmatprep.subr.bf16.mxu0 0
    %1889 = vmatpush1.bf16.msra.mxu0 %v1818
    %1890 = vmatprep.subr.bf16.mxu0 0
    %1891 = vmatpush1.bf16.msra.mxu0 %v1819
    %1892 = vmatprep.subr.bf16.mxu0 0
    %1893 = vmatpush1.bf16.msra.mxu0 %v1820
    %1894 = vmatprep.subr.bf16.mxu0 0
    %1895 = vmatpush1.bf16.msra.mxu0 %v1821
    %1896 = vmatprep.subr.bf16.mxu0 0
    %1897 = vmatpush1.bf16.msra.mxu0 %v1822
    %1898 = vmatprep.subr.bf16.mxu0 0
    %1899 = vmatpush1.bf16.msra.mxu0 %v1823
    %1900 = vmatprep.subr.bf16.mxu0 0
    %1901 = vmatpush1.bf16.msra.mxu0 %v1824
    %1902 = vmatprep.subr.bf16.mxu0 0
    %1903 = vmatpush1.bf16.msra.mxu0 %v1825
    %1904 = vmatprep.subr.bf16.mxu0 0
    %1905 = vmatpush1.bf16.msra.mxu0 %v1826
    %1906 = vmatprep.subr.bf16.mxu0 0
    %1907 = vmatpush1.bf16.msra.mxu0 %v1827
    %1908 = vmatprep.mubr.bf16.mxu0 %v1610
    %1909 = vmatmul.mubr.bf16.gmra.mrb[0].mxu0 %v1609
    %v1910 = vpop.f32.mrb[0].mxu0
    %v1911 = vadd.f32 %v1682, %v1910
    %v1912 = vpop.f32.mrb[0].mxu0
    %v1913 = vpop.f32.mrb[0].mxu0
    %v1914 = vpop.f32.mrb[0].mxu0
    %1915 = vdwg.mxu0
    %1916 = vmatprep.subr.bf16.mxu0 0
    %1917 = vmatpush1.bf16.msra.mxu0 %v1828
    %1918 = vmatprep.subr.bf16.mxu0 0
    %1919 = vmatpush1.bf16.msra.mxu0 %v1829
    %1920 = vmatprep.subr.bf16.mxu0 0
    %1921 = vmatpush1.bf16.msra.mxu0 %v1830
    %1922 = vmatprep.subr.bf16.mxu0 0
    %1923 = vmatpush1.bf16.msra.mxu0 %v1831
    %1924 = vmatprep.subr.bf16.mxu0 0
    %1925 = vmatpush1.bf16.msra.mxu0 %v1832
    %1926 = vmatprep.subr.bf16.mxu0 0
    %1927 = vmatpush1.bf16.msra.mxu0 %v1833
    %1928 = vmatprep.subr.bf16.mxu0 0
    %1929 = vmatpush1.bf16.msra.mxu0 %v1834
    %1930 = vmatprep.subr.bf16.mxu0 0
    %1931 = vmatpush1.bf16.msra.mxu0 %v1835
    %1932 = vmatprep.subr.bf16.mxu0 0
    %1933 = vmatpush1.bf16.msra.mxu0 %v1836
    %1934 = vmatprep.subr.bf16.mxu0 0
    %1935 = vmatpush1.bf16.msra.mxu0 %v1837
    %1936 = vmatprep.subr.bf16.mxu0 0
    %1937 = vmatpush1.bf16.msra.mxu0 %v1838
    %1938 = vmatprep.subr.bf16.mxu0 0
    %1939 = vmatpush1.bf16.msra.mxu0 %v1839
    %1940 = vmatprep.subr.bf16.mxu0 0
    %1941 = vmatpush1.bf16.msra.mxu0 %v1840
    %1942 = vmatprep.subr.bf16.mxu0 0
    %1943 = vmatpush1.bf16.msra.mxu0 %v1841
    %1944 = vmatprep.subr.bf16.mxu0 0
    %1945 = vmatpush1.bf16.msra.mxu0 %v1842
    %1946 = vmatprep.subr.bf16.mxu0 0
    %1947 = vmatpush1.bf16.msra.mxu0 %v1843
    %1948 = vmatprep.mubr.bf16.mxu0 %v1612
    %1949 = vmatmul.mubr.bf16.gmra.mrb[0].mxu0 %v1611
    %v1950 = vpop.f32.mrb[0].mxu0
    %v1951 = vadd.f32 %v1911, %v1950
    %v1952 = vpop.f32.mrb[0].mxu0
    %v1953 = vpop.f32.mrb[0].mxu0
    %v1954 = vpop.f32.mrb[0].mxu0
    %1955 = vdwg.mxu0
    %v1956 = vpack.c.bf16 %v1951, %v1951
    %1957 = vst [vmem:[#allocation8] sm:$0xf] %v1956
    // Predicated region
    $region34: #{tpu_custom_call.1} parent=1 // pred_check
      _
    $region35: #{tpu_custom_call.1} parent=1 // pred_check_branch
      %1959 = sbr.rel (0) target = $region37
    $region36: #{tpu_custom_call.1} parent=1 // pred_region
      %s1961 = ssub.s32 64, 64
      %1962 = vsyncadd [#allocation4], %s1961
      %s1964 = sshll.u32 [#allocation8], 4
      %s1965 = int_to_ptr.vmem [resolvable:$true] %s1964
      %1967 = dma.vmem_to_hbm [thread:$0]  %s1965, 64, %s5, [#allocation4]
    $region37: #{tpu_custom_call.1} parent=1 // pred_fallthru
      _
    // Predicated region
    $region38: #{tpu_custom_call.1} parent=1 // pred_check
      _
    $region39: #{tpu_custom_call.1} parent=1 // pred_check_branch
      %1969 = sbr.rel (0) target = $region41
    $region40: #{tpu_custom_call.1} parent=1 // pred_region
      %1970 = dma.done [#allocation4], 64
    $region41: #{tpu_custom_call.1} parent=1 // pred_fallthru
      _
    %1971 = vsyncpa [#allocation3], 1
    %1972 = vsyncpa [#allocation6], 1
    %1973 = vsyncpa [#allocation4], 1

</llo_original>
